<compile_context>
chip_gen: v6e
topology: v6e:2x2x1
jax: 0.10.0
libtpu: 0.0.40
codegen_flags: <defaults>
</compile_context>

<pallas_src>
import functools

import jax
import jax.numpy as jnp
from jax.experimental import pallas as pl
from jax.experimental.pallas import tpu as pltpu

# ---- config (mirrors config['LSTM']) ----
CONFIG = {
    "LSTM": {
        "input_size": 16,
        "hidden_size": 32,
        "num_layers": 2,
        "num_classes": 10,
    }
}


# ----------------------------- fused Pallas kernel -----------------------------
def _make_fused_kernel(num_layers, T, B, H):
    """Builds a kernel computing `num_layers` stacked LSTMs + final FC.

    Kernel args (in order):
      x_ref                      : (T, B, D)   time-major input
      [wih_ref, whh_ref, b_ref]  : per layer, W_ih^T (D_l,4H), W_hh^T (H,4H), b (1,4H)
      fc_w_ref                   : (H, C)      FC weight, transposed
      fc_b_ref                   : (1, C)
      out_ref                    : (B, C)      output
      y_ref                      : (T, B, H)   f32 scratch, inter-layer activations
      gx_ref                     : (T, B, 4H)  f32 scratch, hoisted input projection
    """

    def kernel(*args):
        x_ref = args[0]
        layer_refs = args[1:1 + 3 * num_layers]
        fc_w_ref = args[1 + 3 * num_layers]
        fc_b_ref = args[2 + 3 * num_layers]
        out_ref = args[3 + 3 * num_layers]
        y_ref = args[4 + 3 * num_layers]
        gx_ref = args[5 + 3 * num_layers]

        h_last = jnp.zeros((B, H), jnp.float32)

        for layer in range(num_layers):
            # Hoist weight loads above the recurrence (loaded once per layer).
            wih = layer_refs[3 * layer][...]      # (D_l, 4H)
            whh = layer_refs[3 * layer + 1][...]  # (H, 4H)
            bias = layer_refs[3 * layer + 2][...]  # (1, 4H)

            inp = x_ref[...] if layer == 0 else y_ref[...]   # (T, B, D_l)
            d_in = inp.shape[-1]

            # Hoisted input projection for the whole sequence:
            # one (T*B, D_l) @ (D_l, 4H) MXU matmul instead of T tiny ones.
            gx = (
                jnp.dot(
                    inp.reshape(T * B, d_in), wih,
                    preferred_element_type=jnp.float32,
                )
                + bias
            )
            gx_ref[...] = gx.reshape(T, B, 4 * H)

            last_layer = layer == num_layers - 1

            def step(t, carry, whh=whh, last_layer=last_layer):
                h, c = carry
                # Only the recurrent matmul remains on the serial path.
                gates = gx_ref[t] + jnp.dot(
                    h, whh, preferred_element_type=jnp.float32
                )                                              # (B, 4H)
                # Lane-dense activations over the full 4H = 128 lanes,
                # then slice out the i/f/g/o gates.
                sig = jax.nn.sigmoid(gates)
                th = jnp.tanh(gates)
                i = sig[:, 0:H]
                f = sig[:, H:2 * H]
                g = th[:, 2 * H:3 * H]
                o = sig[:, 3 * H:4 * H]
                c_new = f * c + i * g
                h_new = o * jnp.tanh(c_new)
                if not last_layer:
                    y_ref[t] = h_new      # feed the next layer (stays in VMEM)
                return h_new, c_new

            h0 = jnp.zeros((B, H), jnp.float32)
            c0 = jnp.zeros((B, H), jnp.float32)
            h_last, _ = jax.lax.fori_loop(0, T, step, (h0, c0), unroll=True)

        # Final FC on the last step's hidden state of the top layer.
        out_ref[...] = (
            jnp.dot(h_last, fc_w_ref[...], preferred_element_type=jnp.float32)
            + fc_b_ref[...]
        ).astype(out_ref.dtype)

    return kernel


# ----------------------------- wrappers -----------------------------
def prepare_params(params):
    """One-time prep: transpose weights and fold bias sums (done outside forward)."""
    layers = []
    for (w_ih, w_hh, b_ih, b_hh) in params["lstm"]:
        layers.append(
            (
                jnp.transpose(w_ih),                     # (D_l, 4H)
                jnp.transpose(w_hh),                     # (H, 4H)
                (b_ih + b_hh).reshape(1, -1),            # (1, 4H)
            )
        )
    C = params["fc_b"].shape[0]
    return {
        "lstm": tuple(layers),
        "fc_w_t": jnp.transpose(params["fc_w"]),         # (H, C)
        "fc_b": params["fc_b"].reshape(1, C),            # (1, C)
    }


@jax.jit
def lstm_forward(x, prepped):
    """x: (B, T, input_size) batch-first, like PyTorch forward()."""
    B, T, _ = x.shape
    H = prepped["lstm"][0][1].shape[0]
    C = prepped["fc_b"].shape[1]
    L = len(prepped["lstm"])

    x_tbd = jnp.transpose(x, (1, 0, 2))                  # -> (T, B, D) time-major

    flat_weights = []
    for layer in prepped["lstm"]:
        flat_weights.extend(layer)

    n_inputs = 1 + 3 * L + 2
    kernel = _make_fused_kernel(L, T, B, H)

    # NOTE: at larger T/B the whole-sequence-in-VMEM layout should switch to
    # T-chunk streaming (manual double-buffered DMA) and a parallel batch grid
    # axis (v7x, 2 TCs); at these tiny shapes a single fused call is optimal.
    return pl.pallas_call(
        kernel,
        out_shape=jax.ShapeDtypeStruct((B, C), x.dtype),
        in_specs=[pl.BlockSpec(memory_space=pltpu.MemorySpace.VMEM)] * n_inputs,
        out_specs=pl.BlockSpec(memory_space=pltpu.MemorySpace.VMEM),
        scratch_shapes=[
            pltpu.VMEM((T, B, H), jnp.float32),          # inter-layer activations
            pltpu.VMEM((T, B, 4 * H), jnp.float32),      # hoisted input projection
        ],
    )(x_tbd, *flat_weights, prepped["fc_w_t"], prepped["fc_b"])


# ----------------------------- params & reference -----------------------------
def init_params(key, cfg):
    D = cfg["input_size"]
    H = cfg["hidden_size"]
    L = cfg["num_layers"]
    C = cfg["num_classes"]
    k_lstm = 1.0 / jnp.sqrt(jnp.float32(H))

    lstm_params = []
    in_size = D
    for _ in range(L):
        key, k1, k2, k3, k4 = jax.random.split(key, 5)
        w_ih = jax.random.uniform(k1, (4 * H, in_size), jnp.float32, -k_lstm, k_lstm)
        w_hh = jax.random.uniform(k2, (4 * H, H), jnp.float32, -k_lstm, k_lstm)
        b_ih = jax.random.uniform(k3, (4 * H,), jnp.float32, -k_lstm, k_lstm)
        b_hh = jax.random.uniform(k4, (4 * H,), jnp.float32, -k_lstm, k_lstm)
        lstm_params.append((w_ih, w_hh, b_ih, b_hh))
        in_size = H

    key, k5, k6 = jax.random.split(key, 3)
    k_fc = 1.0 / jnp.sqrt(jnp.float32(H))
    fc_w = jax.random.uniform(k5, (C, H), jnp.float32, -k_fc, k_fc)
    fc_b = jax.random.uniform(k6, (C,), jnp.float32, -k_fc, k_fc)
    return {"lstm": lstm_params, "fc_w": fc_w, "fc_b": fc_b}


def lstm_ref(x, params):
    """Pure-JAX reference matching torch.nn.LSTM semantics (gate order i,f,g,o)."""
    out = x
    for (w_ih, w_hh, b_ih, b_hh) in params["lstm"]:
        B, T, _ = out.shape
        H = w_hh.shape[1]
        h = jnp.zeros((B, H), jnp.float32)
        c = jnp.zeros((B, H), jnp.float32)
        ys = []
        for t in range(T):
            gates = out[:, t, :] @ w_ih.T + b_ih + h @ w_hh.T + b_hh
            i = jax.nn.sigmoid(gates[:, 0:H])
            f = jax.nn.sigmoid(gates[:, H:2 * H])
            g = jnp.tanh(gates[:, 2 * H:3 * H])
            o = jax.nn.sigmoid(gates[:, 3 * H:4 * H])
            c = f * c + i * g
            h = o * jnp.tanh(c)
            ys.append(h)
        out = jnp.stack(ys, axis=1)
    return out[:, -1, :] @ params["fc_w"].T + params["fc_b"]


# ----------------------------- main -----------------------------
if __name__ == "__main__":
    cfg = CONFIG["LSTM"]
    B, T = 2, 8

    key = jax.random.PRNGKey(0)
    key, kx, kp = jax.random.split(key, 3)
    x = jax.random.normal(kx, (B, T, cfg["input_size"]), jnp.float32)
    params = init_params(kp, cfg)
    prepped = prepare_params(params)

    out = lstm_forward(x, prepped)
    out = jax.block_until_ready(out)

    ref = lstm_ref(x, params)
    assert out.shape == (B, cfg["num_classes"])
    assert jnp.allclose(out, ref, rtol=1e-3, atol=1e-3), (
        f"mismatch: max abs err {jnp.max(jnp.abs(out - ref))}"
    )
    print("KERNEL_OK")
</pallas_src>

<mosaic_0001>
module attributes {stable_mosaic.version = 11 : i64} {
  func.func @kernel(%arg0: memref<8x2x16xf32, #tpu.memory_space<vmem>>, %arg1: memref<16x128xf32, #tpu.memory_space<vmem>>, %arg2: memref<32x128xf32, #tpu.memory_space<vmem>>, %arg3: memref<1x128xf32, #tpu.memory_space<vmem>>, %arg4: memref<32x128xf32, #tpu.memory_space<vmem>>, %arg5: memref<32x128xf32, #tpu.memory_space<vmem>>, %arg6: memref<1x128xf32, #tpu.memory_space<vmem>>, %arg7: memref<32x10xf32, #tpu.memory_space<vmem>>, %arg8: memref<1x10xf32, #tpu.memory_space<vmem>>, %arg9: memref<2x10xf32, #tpu.memory_space<vmem>>, %arg10: memref<8x2x32xf32, #tpu.memory_space<vmem>>, %arg11: memref<8x2x128xf32, #tpu.memory_space<vmem>>) attributes {dimension_semantics = [], scalar_prefetch = 0 : i64, scratch_operands = 2 : i64, tpu.core_type = #tpu.core_type<tc>} {
    %c0 = arith.constant 0 : index
    %c0_0 = arith.constant 0 : index
    %0 = vector.load %arg1[%c0, %c0_0] : memref<16x128xf32, #tpu.memory_space<vmem>>, vector<16x128xf32>
    %c0_1 = arith.constant 0 : index
    %c0_2 = arith.constant 0 : index
    %1 = vector.load %arg2[%c0_1, %c0_2] : memref<32x128xf32, #tpu.memory_space<vmem>>, vector<32x128xf32>
    %c0_3 = arith.constant 0 : index
    %c0_4 = arith.constant 0 : index
    %2 = vector.load %arg3[%c0_3, %c0_4] : memref<1x128xf32, #tpu.memory_space<vmem>>, vector<1x128xf32>
    %c0_5 = arith.constant 0 : index
    %c0_6 = arith.constant 0 : index
    %c0_7 = arith.constant 0 : index
    %3 = vector.load %arg0[%c0_5, %c0_6, %c0_7] : memref<8x2x16xf32, #tpu.memory_space<vmem>>, vector<8x2x16xf32>
    %4 = vector.shape_cast %3 : vector<8x2x16xf32> to vector<16x16xf32>
    %cst = arith.constant dense<0.000000e+00> : vector<16x128xf32>
    %5 = tpu.matmul %4, %0, %cst {dimension_numbers = #tpu.dot_dimension_numbers<[1], [0], [0], [1], [0, 0, 1, 1], [], []>} : vector<16x16xf32>, vector<16x128xf32>, vector<16x128xf32> -> vector<16x128xf32>
    %6 = vector.broadcast %2 : vector<1x128xf32> to vector<16x128xf32>
    %7 = arith.addf %5, %6 : vector<16x128xf32>
    %8 = vector.shape_cast %7 : vector<16x128xf32> to vector<8x2x128xf32>
    %c0_8 = arith.constant 0 : index
    %c0_9 = arith.constant 0 : index
    %c0_10 = arith.constant 0 : index
    %9 = vector.load %arg11[%c0_8, %c0_9, %c0_10] : memref<8x2x128xf32, #tpu.memory_space<vmem>>, vector<8x2x128xf32>
    tpu.vector_store %arg11[%c0_8, %c0_9, %c0_10], %8 {strides = array<i32>} : memref<8x2x128xf32, #tpu.memory_space<vmem>>, vector<8x2x128xf32>,
    %cst_11 = arith.constant 0.000000e+00 : f32
    %10 = vector.broadcast %cst_11 : f32 to vector<2x32xf32>
    %cst_12 = arith.constant 0.000000e+00 : f32
    %11 = vector.broadcast %cst_12 : f32 to vector<2x32xf32>
    %c0_i32 = arith.constant 0 : i32
    %12 = arith.index_cast %c0_i32 : i32 to index
    %c0_13 = arith.constant 0 : index
    %c0_14 = arith.constant 0 : index
    %13 = vector.load %arg11[%12, %c0_13, %c0_14] : memref<8x2x128xf32, #tpu.memory_space<vmem>>, vector<1x2x128xf32>
    %14 = vector.shape_cast %13 : vector<1x2x128xf32> to vector<2x128xf32>
    %cst_15 = arith.constant dense<0.000000e+00> : vector<2x128xf32>
    %15 = tpu.matmul %10, %1, %cst_15 {dimension_numbers = #tpu.dot_dimension_numbers<[1], [0], [0], [1], [0, 0, 1, 1], [], []>} : vector<2x32xf32>, vector<32x128xf32>, vector<2x128xf32> -> vector<2x128xf32>
    %16 = arith.addf %14, %15 : vector<2x128xf32>
    %17 = arith.negf %16 : vector<2x128xf32>
    %18 = math.exp %17 : vector<2x128xf32>
    %cst_16 = arith.constant 1.000000e+00 : f32
    %19 = vector.broadcast %cst_16 : f32 to vector<2x128xf32>
    %20 = arith.addf %19, %18 : vector<2x128xf32>
    %21 = arith.divf %19, %20 : vector<2x128xf32>
    %22 = math.tanh %16 : vector<2x128xf32>
    %23 = vector.extract_strided_slice %21 {offsets = [0, 0], sizes = [2, 32], strides = [1, 1]} : vector<2x128xf32> to vector<2x32xf32>
    %24 = vector.extract_strided_slice %21 {offsets = [0, 32], sizes = [2, 32], strides = [1, 1]} : vector<2x128xf32> to vector<2x32xf32>
    %25 = vector.extract_strided_slice %22 {offsets = [0, 64], sizes = [2, 32], strides = [1, 1]} : vector<2x128xf32> to vector<2x32xf32>
    %26 = vector.extract_strided_slice %21 {offsets = [0, 96], sizes = [2, 32], strides = [1, 1]} : vector<2x128xf32> to vector<2x32xf32>
    %27 = arith.mulf %24, %11 : vector<2x32xf32>
    %28 = arith.mulf %23, %25 : vector<2x32xf32>
    %29 = arith.addf %27, %28 : vector<2x32xf32>
    %30 = math.tanh %29 : vector<2x32xf32>
    %31 = arith.mulf %26, %30 : vector<2x32xf32>
    %32 = arith.index_cast %c0_i32 : i32 to index
    %c0_17 = arith.constant 0 : index
    %c0_18 = arith.constant 0 : index
    %33 = vector.load %arg10[%32, %c0_17, %c0_18] : memref<8x2x32xf32, #tpu.memory_space<vmem>>, vector<1x2x32xf32>
    %34 = vector.shape_cast %33 : vector<1x2x32xf32> to vector<2x32xf32>
    %35 = vector.shape_cast %31 : vector<2x32xf32> to vector<1x2x32xf32>
    tpu.vector_store %arg10[%32, %c0_17, %c0_18], %35 {strides = array<i32>} : memref<8x2x32xf32, #tpu.memory_space<vmem>>, vector<1x2x32xf32>,
    %c1_i32 = arith.constant 1 : i32
    %36 = arith.index_cast %c1_i32 : i32 to index
    %c0_19 = arith.constant 0 : index
    %c0_20 = arith.constant 0 : index
    %37 = vector.load %arg11[%36, %c0_19, %c0_20] : memref<8x2x128xf32, #tpu.memory_space<vmem>>, vector<1x2x128xf32>
    %38 = vector.shape_cast %37 : vector<1x2x128xf32> to vector<2x128xf32>
    %cst_21 = arith.constant dense<0.000000e+00> : vector<2x128xf32>
    %39 = tpu.matmul %31, %1, %cst_21 {dimension_numbers = #tpu.dot_dimension_numbers<[1], [0], [0], [1], [0, 0, 1, 1], [], []>} : vector<2x32xf32>, vector<32x128xf32>, vector<2x128xf32> -> vector<2x128xf32>
    %40 = arith.addf %38, %39 : vector<2x128xf32>
    %41 = arith.negf %40 : vector<2x128xf32>
    %42 = math.exp %41 : vector<2x128xf32>
    %cst_22 = arith.constant 1.000000e+00 : f32
    %43 = vector.broadcast %cst_22 : f32 to vector<2x128xf32>
    %44 = arith.addf %43, %42 : vector<2x128xf32>
    %45 = arith.divf %43, %44 : vector<2x128xf32>
    %46 = math.tanh %40 : vector<2x128xf32>
    %47 = vector.extract_strided_slice %45 {offsets = [0, 0], sizes = [2, 32], strides = [1, 1]} : vector<2x128xf32> to vector<2x32xf32>
    %48 = vector.extract_strided_slice %45 {offsets = [0, 32], sizes = [2, 32], strides = [1, 1]} : vector<2x128xf32> to vector<2x32xf32>
    %49 = vector.extract_strided_slice %46 {offsets = [0, 64], sizes = [2, 32], strides = [1, 1]} : vector<2x128xf32> to vector<2x32xf32>
    %50 = vector.extract_strided_slice %45 {offsets = [0, 96], sizes = [2, 32], strides = [1, 1]} : vector<2x128xf32> to vector<2x32xf32>
    %51 = arith.mulf %48, %29 : vector<2x32xf32>
    %52 = arith.mulf %47, %49 : vector<2x32xf32>
    %53 = arith.addf %51, %52 : vector<2x32xf32>
    %54 = math.tanh %53 : vector<2x32xf32>
    %55 = arith.mulf %50, %54 : vector<2x32xf32>
    %56 = arith.index_cast %c1_i32 : i32 to index
    %c0_23 = arith.constant 0 : index
    %c0_24 = arith.constant 0 : index
    %57 = vector.load %arg10[%56, %c0_23, %c0_24] : memref<8x2x32xf32, #tpu.memory_space<vmem>>, vector<1x2x32xf32>
    %58 = vector.shape_cast %57 : vector<1x2x32xf32> to vector<2x32xf32>
    %59 = vector.shape_cast %55 : vector<2x32xf32> to vector<1x2x32xf32>
    tpu.vector_store %arg10[%56, %c0_23, %c0_24], %59 {strides = array<i32>} : memref<8x2x32xf32, #tpu.memory_space<vmem>>, vector<1x2x32xf32>,
    %c2_i32 = arith.constant 2 : i32
    %60 = arith.index_cast %c2_i32 : i32 to index
    %c0_25 = arith.constant 0 : index
    %c0_26 = arith.constant 0 : index
    %61 = vector.load %arg11[%60, %c0_25, %c0_26] : memref<8x2x128xf32, #tpu.memory_space<vmem>>, vector<1x2x128xf32>
    %62 = vector.shape_cast %61 : vector<1x2x128xf32> to vector<2x128xf32>
    %cst_27 = arith.constant dense<0.000000e+00> : vector<2x128xf32>
    %63 = tpu.matmul %55, %1, %cst_27 {dimension_numbers = #tpu.dot_dimension_numbers<[1], [0], [0], [1], [0, 0, 1, 1], [], []>} : vector<2x32xf32>, vector<32x128xf32>, vector<2x128xf32> -> vector<2x128xf32>
    %64 = arith.addf %62, %63 : vector<2x128xf32>
    %65 = arith.negf %64 : vector<2x128xf32>
    %66 = math.exp %65 : vector<2x128xf32>
    %cst_28 = arith.constant 1.000000e+00 : f32
    %67 = vector.broadcast %cst_28 : f32 to vector<2x128xf32>
    %68 = arith.addf %67, %66 : vector<2x128xf32>
    %69 = arith.divf %67, %68 : vector<2x128xf32>
    %70 = math.tanh %64 : vector<2x128xf32>
    %71 = vector.extract_strided_slice %69 {offsets = [0, 0], sizes = [2, 32], strides = [1, 1]} : vector<2x128xf32> to vector<2x32xf32>
    %72 = vector.extract_strided_slice %69 {offsets = [0, 32], sizes = [2, 32], strides = [1, 1]} : vector<2x128xf32> to vector<2x32xf32>
    %73 = vector.extract_strided_slice %70 {offsets = [0, 64], sizes = [2, 32], strides = [1, 1]} : vector<2x128xf32> to vector<2x32xf32>
    %74 = vector.extract_strided_slice %69 {offsets = [0, 96], sizes = [2, 32], strides = [1, 1]} : vector<2x128xf32> to vector<2x32xf32>
    %75 = arith.mulf %72, %53 : vector<2x32xf32>
    %76 = arith.mulf %71, %73 : vector<2x32xf32>
    %77 = arith.addf %75, %76 : vector<2x32xf32>
    %78 = math.tanh %77 : vector<2x32xf32>
    %79 = arith.mulf %74, %78 : vector<2x32xf32>
    %80 = arith.index_cast %c2_i32 : i32 to index
    %c0_29 = arith.constant 0 : index
    %c0_30 = arith.constant 0 : index
    %81 = vector.load %arg10[%80, %c0_29, %c0_30] : memref<8x2x32xf32, #tpu.memory_space<vmem>>, vector<1x2x32xf32>
    %82 = vector.shape_cast %81 : vector<1x2x32xf32> to vector<2x32xf32>
    %83 = vector.shape_cast %79 : vector<2x32xf32> to vector<1x2x32xf32>
    tpu.vector_store %arg10[%80, %c0_29, %c0_30], %83 {strides = array<i32>} : memref<8x2x32xf32, #tpu.memory_space<vmem>>, vector<1x2x32xf32>,
    %c3_i32 = arith.constant 3 : i32
    %84 = arith.index_cast %c3_i32 : i32 to index
    %c0_31 = arith.constant 0 : index
    %c0_32 = arith.constant 0 : index
    %85 = vector.load %arg11[%84, %c0_31, %c0_32] : memref<8x2x128xf32, #tpu.memory_space<vmem>>, vector<1x2x128xf32>
    %86 = vector.shape_cast %85 : vector<1x2x128xf32> to vector<2x128xf32>
    %cst_33 = arith.constant dense<0.000000e+00> : vector<2x128xf32>
    %87 = tpu.matmul %79, %1, %cst_33 {dimension_numbers = #tpu.dot_dimension_numbers<[1], [0], [0], [1], [0, 0, 1, 1], [], []>} : vector<2x32xf32>, vector<32x128xf32>, vector<2x128xf32> -> vector<2x128xf32>
    %88 = arith.addf %86, %87 : vector<2x128xf32>
    %89 = arith.negf %88 : vector<2x128xf32>
    %90 = math.exp %89 : vector<2x128xf32>
    %cst_34 = arith.constant 1.000000e+00 : f32
    %91 = vector.broadcast %cst_34 : f32 to vector<2x128xf32>
    %92 = arith.addf %91, %90 : vector<2x128xf32>
    %93 = arith.divf %91, %92 : vector<2x128xf32>
    %94 = math.tanh %88 : vector<2x128xf32>
    %95 = vector.extract_strided_slice %93 {offsets = [0, 0], sizes = [2, 32], strides = [1, 1]} : vector<2x128xf32> to vector<2x32xf32>
    %96 = vector.extract_strided_slice %93 {offsets = [0, 32], sizes = [2, 32], strides = [1, 1]} : vector<2x128xf32> to vector<2x32xf32>
    %97 = vector.extract_strided_slice %94 {offsets = [0, 64], sizes = [2, 32], strides = [1, 1]} : vector<2x128xf32> to vector<2x32xf32>
    %98 = vector.extract_strided_slice %93 {offsets = [0, 96], sizes = [2, 32], strides = [1, 1]} : vector<2x128xf32> to vector<2x32xf32>
    %99 = arith.mulf %96, %77 : vector<2x32xf32>
    %100 = arith.mulf %95, %97 : vector<2x32xf32>
    %101 = arith.addf %99, %100 : vector<2x32xf32>
    %102 = math.tanh %101 : vector<2x32xf32>
    %103 = arith.mulf %98, %102 : vector<2x32xf32>
    %104 = arith.index_cast %c3_i32 : i32 to index
    %c0_35 = arith.constant 0 : index
    %c0_36 = arith.constant 0 : index
    %105 = vector.load %arg10[%104, %c0_35, %c0_36] : memref<8x2x32xf32, #tpu.memory_space<vmem>>, vector<1x2x32xf32>
    %106 = vector.shape_cast %105 : vector<1x2x32xf32> to vector<2x32xf32>
    %107 = vector.shape_cast %103 : vector<2x32xf32> to vector<1x2x32xf32>
    tpu.vector_store %arg10[%104, %c0_35, %c0_36], %107 {strides = array<i32>} : memref<8x2x32xf32, #tpu.memory_space<vmem>>, vector<1x2x32xf32>,
    %c4_i32 = arith.constant 4 : i32
    %108 = arith.index_cast %c4_i32 : i32 to index
    %c0_37 = arith.constant 0 : index
    %c0_38 = arith.constant 0 : index
    %109 = vector.load %arg11[%108, %c0_37, %c0_38] : memref<8x2x128xf32, #tpu.memory_space<vmem>>, vector<1x2x128xf32>
    %110 = vector.shape_cast %109 : vector<1x2x128xf32> to vector<2x128xf32>
    %cst_39 = arith.constant dense<0.000000e+00> : vector<2x128xf32>
    %111 = tpu.matmul %103, %1, %cst_39 {dimension_numbers = #tpu.dot_dimension_numbers<[1], [0], [0], [1], [0, 0, 1, 1], [], []>} : vector<2x32xf32>, vector<32x128xf32>, vector<2x128xf32> -> vector<2x128xf32>
    %112 = arith.addf %110, %111 : vector<2x128xf32>
    %113 = arith.negf %112 : vector<2x128xf32>
    %114 = math.exp %113 : vector<2x128xf32>
    %cst_40 = arith.constant 1.000000e+00 : f32
    %115 = vector.broadcast %cst_40 : f32 to vector<2x128xf32>
    %116 = arith.addf %115, %114 : vector<2x128xf32>
    %117 = arith.divf %115, %116 : vector<2x128xf32>
    %118 = math.tanh %112 : vector<2x128xf32>
    %119 = vector.extract_strided_slice %117 {offsets = [0, 0], sizes = [2, 32], strides = [1, 1]} : vector<2x128xf32> to vector<2x32xf32>
    %120 = vector.extract_strided_slice %117 {offsets = [0, 32], sizes = [2, 32], strides = [1, 1]} : vector<2x128xf32> to vector<2x32xf32>
    %121 = vector.extract_strided_slice %118 {offsets = [0, 64], sizes = [2, 32], strides = [1, 1]} : vector<2x128xf32> to vector<2x32xf32>
    %122 = vector.extract_strided_slice %117 {offsets = [0, 96], sizes = [2, 32], strides = [1, 1]} : vector<2x128xf32> to vector<2x32xf32>
    %123 = arith.mulf %120, %101 : vector<2x32xf32>
    %124 = arith.mulf %119, %121 : vector<2x32xf32>
    %125 = arith.addf %123, %124 : vector<2x32xf32>
    %126 = math.tanh %125 : vector<2x32xf32>
    %127 = arith.mulf %122, %126 : vector<2x32xf32>
    %128 = arith.index_cast %c4_i32 : i32 to index
    %c0_41 = arith.constant 0 : index
    %c0_42 = arith.constant 0 : index
    %129 = vector.load %arg10[%128, %c0_41, %c0_42] : memref<8x2x32xf32, #tpu.memory_space<vmem>>, vector<1x2x32xf32>
    %130 = vector.shape_cast %129 : vector<1x2x32xf32> to vector<2x32xf32>
    %131 = vector.shape_cast %127 : vector<2x32xf32> to vector<1x2x32xf32>
    tpu.vector_store %arg10[%128, %c0_41, %c0_42], %131 {strides = array<i32>} : memref<8x2x32xf32, #tpu.memory_space<vmem>>, vector<1x2x32xf32>,
    %c5_i32 = arith.constant 5 : i32
    %132 = arith.index_cast %c5_i32 : i32 to index
    %c0_43 = arith.constant 0 : index
    %c0_44 = arith.constant 0 : index
    %133 = vector.load %arg11[%132, %c0_43, %c0_44] : memref<8x2x128xf32, #tpu.memory_space<vmem>>, vector<1x2x128xf32>
    %134 = vector.shape_cast %133 : vector<1x2x128xf32> to vector<2x128xf32>
    %cst_45 = arith.constant dense<0.000000e+00> : vector<2x128xf32>
    %135 = tpu.matmul %127, %1, %cst_45 {dimension_numbers = #tpu.dot_dimension_numbers<[1], [0], [0], [1], [0, 0, 1, 1], [], []>} : vector<2x32xf32>, vector<32x128xf32>, vector<2x128xf32> -> vector<2x128xf32>
    %136 = arith.addf %134, %135 : vector<2x128xf32>
    %137 = arith.negf %136 : vector<2x128xf32>
    %138 = math.exp %137 : vector<2x128xf32>
    %cst_46 = arith.constant 1.000000e+00 : f32
    %139 = vector.broadcast %cst_46 : f32 to vector<2x128xf32>
    %140 = arith.addf %139, %138 : vector<2x128xf32>
    %141 = arith.divf %139, %140 : vector<2x128xf32>
    %142 = math.tanh %136 : vector<2x128xf32>
    %143 = vector.extract_strided_slice %141 {offsets = [0, 0], sizes = [2, 32], strides = [1, 1]} : vector<2x128xf32> to vector<2x32xf32>
    %144 = vector.extract_strided_slice %141 {offsets = [0, 32], sizes = [2, 32], strides = [1, 1]} : vector<2x128xf32> to vector<2x32xf32>
    %145 = vector.extract_strided_slice %142 {offsets = [0, 64], sizes = [2, 32], strides = [1, 1]} : vector<2x128xf32> to vector<2x32xf32>
    %146 = vector.extract_strided_slice %141 {offsets = [0, 96], sizes = [2, 32], strides = [1, 1]} : vector<2x128xf32> to vector<2x32xf32>
    %147 = arith.mulf %144, %125 : vector<2x32xf32>
    %148 = arith.mulf %143, %145 : vector<2x32xf32>
    %149 = arith.addf %147, %148 : vector<2x32xf32>
    %150 = math.tanh %149 : vector<2x32xf32>
    %151 = arith.mulf %146, %150 : vector<2x32xf32>
    %152 = arith.index_cast %c5_i32 : i32 to index
    %c0_47 = arith.constant 0 : index
    %c0_48 = arith.constant 0 : index
    %153 = vector.load %arg10[%152, %c0_47, %c0_48] : memref<8x2x32xf32, #tpu.memory_space<vmem>>, vector<1x2x32xf32>
    %154 = vector.shape_cast %153 : vector<1x2x32xf32> to vector<2x32xf32>
    %155 = vector.shape_cast %151 : vector<2x32xf32> to vector<1x2x32xf32>
    tpu.vector_store %arg10[%152, %c0_47, %c0_48], %155 {strides = array<i32>} : memref<8x2x32xf32, #tpu.memory_space<vmem>>, vector<1x2x32xf32>,
    %c6_i32 = arith.constant 6 : i32
    %156 = arith.index_cast %c6_i32 : i32 to index
    %c0_49 = arith.constant 0 : index
    %c0_50 = arith.constant 0 : index
    %157 = vector.load %arg11[%156, %c0_49, %c0_50] : memref<8x2x128xf32, #tpu.memory_space<vmem>>, vector<1x2x128xf32>
    %158 = vector.shape_cast %157 : vector<1x2x128xf32> to vector<2x128xf32>
    %cst_51 = arith.constant dense<0.000000e+00> : vector<2x128xf32>
    %159 = tpu.matmul %151, %1, %cst_51 {dimension_numbers = #tpu.dot_dimension_numbers<[1], [0], [0], [1], [0, 0, 1, 1], [], []>} : vector<2x32xf32>, vector<32x128xf32>, vector<2x128xf32> -> vector<2x128xf32>
    %160 = arith.addf %158, %159 : vector<2x128xf32>
    %161 = arith.negf %160 : vector<2x128xf32>
    %162 = math.exp %161 : vector<2x128xf32>
    %cst_52 = arith.constant 1.000000e+00 : f32
    %163 = vector.broadcast %cst_52 : f32 to vector<2x128xf32>
    %164 = arith.addf %163, %162 : vector<2x128xf32>
    %165 = arith.divf %163, %164 : vector<2x128xf32>
    %166 = math.tanh %160 : vector<2x128xf32>
    %167 = vector.extract_strided_slice %165 {offsets = [0, 0], sizes = [2, 32], strides = [1, 1]} : vector<2x128xf32> to vector<2x32xf32>
    %168 = vector.extract_strided_slice %165 {offsets = [0, 32], sizes = [2, 32], strides = [1, 1]} : vector<2x128xf32> to vector<2x32xf32>
    %169 = vector.extract_strided_slice %166 {offsets = [0, 64], sizes = [2, 32], strides = [1, 1]} : vector<2x128xf32> to vector<2x32xf32>
    %170 = vector.extract_strided_slice %165 {offsets = [0, 96], sizes = [2, 32], strides = [1, 1]} : vector<2x128xf32> to vector<2x32xf32>
    %171 = arith.mulf %168, %149 : vector<2x32xf32>
    %172 = arith.mulf %167, %169 : vector<2x32xf32>
    %173 = arith.addf %171, %172 : vector<2x32xf32>
    %174 = math.tanh %173 : vector<2x32xf32>
    %175 = arith.mulf %170, %174 : vector<2x32xf32>
    %176 = arith.index_cast %c6_i32 : i32 to index
    %c0_53 = arith.constant 0 : index
    %c0_54 = arith.constant 0 : index
    %177 = vector.load %arg10[%176, %c0_53, %c0_54] : memref<8x2x32xf32, #tpu.memory_space<vmem>>, vector<1x2x32xf32>
    %178 = vector.shape_cast %177 : vector<1x2x32xf32> to vector<2x32xf32>
    %179 = vector.shape_cast %175 : vector<2x32xf32> to vector<1x2x32xf32>
    tpu.vector_store %arg10[%176, %c0_53, %c0_54], %179 {strides = array<i32>} : memref<8x2x32xf32, #tpu.memory_space<vmem>>, vector<1x2x32xf32>,
    %c7_i32 = arith.constant 7 : i32
    %180 = arith.index_cast %c7_i32 : i32 to index
    %c0_55 = arith.constant 0 : index
    %c0_56 = arith.constant 0 : index
    %181 = vector.load %arg11[%180, %c0_55, %c0_56] : memref<8x2x128xf32, #tpu.memory_space<vmem>>, vector<1x2x128xf32>
    %182 = vector.shape_cast %181 : vector<1x2x128xf32> to vector<2x128xf32>
    %cst_57 = arith.constant dense<0.000000e+00> : vector<2x128xf32>
    %183 = tpu.matmul %175, %1, %cst_57 {dimension_numbers = #tpu.dot_dimension_numbers<[1], [0], [0], [1], [0, 0, 1, 1], [], []>} : vector<2x32xf32>, vector<32x128xf32>, vector<2x128xf32> -> vector<2x128xf32>
    %184 = arith.addf %182, %183 : vector<2x128xf32>
    %185 = arith.negf %184 : vector<2x128xf32>
    %186 = math.exp %185 : vector<2x128xf32>
    %cst_58 = arith.constant 1.000000e+00 : f32
    %187 = vector.broadcast %cst_58 : f32 to vector<2x128xf32>
    %188 = arith.addf %187, %186 : vector<2x128xf32>
    %189 = arith.divf %187, %188 : vector<2x128xf32>
    %190 = math.tanh %184 : vector<2x128xf32>
    %191 = vector.extract_strided_slice %189 {offsets = [0, 0], sizes = [2, 32], strides = [1, 1]} : vector<2x128xf32> to vector<2x32xf32>
    %192 = vector.extract_strided_slice %189 {offsets = [0, 32], sizes = [2, 32], strides = [1, 1]} : vector<2x128xf32> to vector<2x32xf32>
    %193 = vector.extract_strided_slice %190 {offsets = [0, 64], sizes = [2, 32], strides = [1, 1]} : vector<2x128xf32> to vector<2x32xf32>
    %194 = vector.extract_strided_slice %189 {offsets = [0, 96], sizes = [2, 32], strides = [1, 1]} : vector<2x128xf32> to vector<2x32xf32>
    %195 = arith.mulf %192, %173 : vector<2x32xf32>
    %196 = arith.mulf %191, %193 : vector<2x32xf32>
    %197 = arith.addf %195, %196 : vector<2x32xf32>
    %198 = math.tanh %197 : vector<2x32xf32>
    %199 = arith.mulf %194, %198 : vector<2x32xf32>
    %200 = arith.index_cast %c7_i32 : i32 to index
    %c0_59 = arith.constant 0 : index
    %c0_60 = arith.constant 0 : index
    %201 = vector.load %arg10[%200, %c0_59, %c0_60] : memref<8x2x32xf32, #tpu.memory_space<vmem>>, vector<1x2x32xf32>
    %202 = vector.shape_cast %201 : vector<1x2x32xf32> to vector<2x32xf32>
    %203 = vector.shape_cast %199 : vector<2x32xf32> to vector<1x2x32xf32>
    tpu.vector_store %arg10[%200, %c0_59, %c0_60], %203 {strides = array<i32>} : memref<8x2x32xf32, #tpu.memory_space<vmem>>, vector<1x2x32xf32>,
    %c8_i32 = arith.constant 8 : i32
    %c0_61 = arith.constant 0 : index
    %c0_62 = arith.constant 0 : index
    %204 = vector.load %arg4[%c0_61, %c0_62] : memref<32x128xf32, #tpu.memory_space<vmem>>, vector<32x128xf32>
    %c0_63 = arith.constant 0 : index
    %c0_64 = arith.constant 0 : index
    %205 = vector.load %arg5[%c0_63, %c0_64] : memref<32x128xf32, #tpu.memory_space<vmem>>, vector<32x128xf32>
    %c0_65 = arith.constant 0 : index
    %c0_66 = arith.constant 0 : index
    %206 = vector.load %arg6[%c0_65, %c0_66] : memref<1x128xf32, #tpu.memory_space<vmem>>, vector<1x128xf32>
    %c0_67 = arith.constant 0 : index
    %c0_68 = arith.constant 0 : index
    %c0_69 = arith.constant 0 : index
    %207 = vector.load %arg10[%c0_67, %c0_68, %c0_69] : memref<8x2x32xf32, #tpu.memory_space<vmem>>, vector<8x2x32xf32>
    %208 = vector.shape_cast %207 : vector<8x2x32xf32> to vector<16x32xf32>
    %cst_70 = arith.constant dense<0.000000e+00> : vector<16x128xf32>
    %209 = tpu.matmul %208, %204, %cst_70 {dimension_numbers = #tpu.dot_dimension_numbers<[1], [0], [0], [1], [0, 0, 1, 1], [], []>} : vector<16x32xf32>, vector<32x128xf32>, vector<16x128xf32> -> vector<16x128xf32>
    %210 = vector.broadcast %206 : vector<1x128xf32> to vector<16x128xf32>
    %211 = arith.addf %209, %210 : vector<16x128xf32>
    %212 = vector.shape_cast %211 : vector<16x128xf32> to vector<8x2x128xf32>
    %c0_71 = arith.constant 0 : index
    %c0_72 = arith.constant 0 : index
    %c0_73 = arith.constant 0 : index
    %213 = vector.load %arg11[%c0_71, %c0_72, %c0_73] : memref<8x2x128xf32, #tpu.memory_space<vmem>>, vector<8x2x128xf32>
    tpu.vector_store %arg11[%c0_71, %c0_72, %c0_73], %212 {strides = array<i32>} : memref<8x2x128xf32, #tpu.memory_space<vmem>>, vector<8x2x128xf32>,
    %cst_74 = arith.constant 0.000000e+00 : f32
    %214 = vector.broadcast %cst_74 : f32 to vector<2x32xf32>
    %cst_75 = arith.constant 0.000000e+00 : f32
    %215 = vector.broadcast %cst_75 : f32 to vector<2x32xf32>
    %c0_i32_76 = arith.constant 0 : i32
    %216 = arith.index_cast %c0_i32_76 : i32 to index
    %c0_77 = arith.constant 0 : index
    %c0_78 = arith.constant 0 : index
    %217 = vector.load %arg11[%216, %c0_77, %c0_78] : memref<8x2x128xf32, #tpu.memory_space<vmem>>, vector<1x2x128xf32>
    %218 = vector.shape_cast %217 : vector<1x2x128xf32> to vector<2x128xf32>
    %cst_79 = arith.constant dense<0.000000e+00> : vector<2x128xf32>
    %219 = tpu.matmul %214, %205, %cst_79 {dimension_numbers = #tpu.dot_dimension_numbers<[1], [0], [0], [1], [0, 0, 1, 1], [], []>} : vector<2x32xf32>, vector<32x128xf32>, vector<2x128xf32> -> vector<2x128xf32>
    %220 = arith.addf %218, %219 : vector<2x128xf32>
    %221 = arith.negf %220 : vector<2x128xf32>
    %222 = math.exp %221 : vector<2x128xf32>
    %cst_80 = arith.constant 1.000000e+00 : f32
    %223 = vector.broadcast %cst_80 : f32 to vector<2x128xf32>
    %224 = arith.addf %223, %222 : vector<2x128xf32>
    %225 = arith.divf %223, %224 : vector<2x128xf32>
    %226 = math.tanh %220 : vector<2x128xf32>
    %227 = vector.extract_strided_slice %225 {offsets = [0, 0], sizes = [2, 32], strides = [1, 1]} : vector<2x128xf32> to vector<2x32xf32>
    %228 = vector.extract_strided_slice %225 {offsets = [0, 32], sizes = [2, 32], strides = [1, 1]} : vector<2x128xf32> to vector<2x32xf32>
    %229 = vector.extract_strided_slice %226 {offsets = [0, 64], sizes = [2, 32], strides = [1, 1]} : vector<2x128xf32> to vector<2x32xf32>
    %230 = vector.extract_strided_slice %225 {offsets = [0, 96], sizes = [2, 32], strides = [1, 1]} : vector<2x128xf32> to vector<2x32xf32>
    %231 = arith.mulf %228, %215 : vector<2x32xf32>
    %232 = arith.mulf %227, %229 : vector<2x32xf32>
    %233 = arith.addf %231, %232 : vector<2x32xf32>
    %234 = math.tanh %233 : vector<2x32xf32>
    %235 = arith.mulf %230, %234 : vector<2x32xf32>
    %c1_i32_81 = arith.constant 1 : i32
    %236 = arith.index_cast %c1_i32_81 : i32 to index
    %c0_82 = arith.constant 0 : index
    %c0_83 = arith.constant 0 : index
    %237 = vector.load %arg11[%236, %c0_82, %c0_83] : memref<8x2x128xf32, #tpu.memory_space<vmem>>, vector<1x2x128xf32>
    %238 = vector.shape_cast %237 : vector<1x2x128xf32> to vector<2x128xf32>
    %cst_84 = arith.constant dense<0.000000e+00> : vector<2x128xf32>
    %239 = tpu.matmul %235, %205, %cst_84 {dimension_numbers = #tpu.dot_dimension_numbers<[1], [0], [0], [1], [0, 0, 1, 1], [], []>} : vector<2x32xf32>, vector<32x128xf32>, vector<2x128xf32> -> vector<2x128xf32>
    %240 = arith.addf %238, %239 : vector<2x128xf32>
    %241 = arith.negf %240 : vector<2x128xf32>
    %242 = math.exp %241 : vector<2x128xf32>
    %cst_85 = arith.constant 1.000000e+00 : f32
    %243 = vector.broadcast %cst_85 : f32 to vector<2x128xf32>
    %244 = arith.addf %243, %242 : vector<2x128xf32>
    %245 = arith.divf %243, %244 : vector<2x128xf32>
    %246 = math.tanh %240 : vector<2x128xf32>
    %247 = vector.extract_strided_slice %245 {offsets = [0, 0], sizes = [2, 32], strides = [1, 1]} : vector<2x128xf32> to vector<2x32xf32>
    %248 = vector.extract_strided_slice %245 {offsets = [0, 32], sizes = [2, 32], strides = [1, 1]} : vector<2x128xf32> to vector<2x32xf32>
    %249 = vector.extract_strided_slice %246 {offsets = [0, 64], sizes = [2, 32], strides = [1, 1]} : vector<2x128xf32> to vector<2x32xf32>
    %250 = vector.extract_strided_slice %245 {offsets = [0, 96], sizes = [2, 32], strides = [1, 1]} : vector<2x128xf32> to vector<2x32xf32>
    %251 = arith.mulf %248, %233 : vector<2x32xf32>
    %252 = arith.mulf %247, %249 : vector<2x32xf32>
    %253 = arith.addf %251, %252 : vector<2x32xf32>
    %254 = math.tanh %253 : vector<2x32xf32>
    %255 = arith.mulf %250, %254 : vector<2x32xf32>
    %c2_i32_86 = arith.constant 2 : i32
    %256 = arith.index_cast %c2_i32_86 : i32 to index
    %c0_87 = arith.constant 0 : index
    %c0_88 = arith.constant 0 : index
    %257 = vector.load %arg11[%256, %c0_87, %c0_88] : memref<8x2x128xf32, #tpu.memory_space<vmem>>, vector<1x2x128xf32>
    %258 = vector.shape_cast %257 : vector<1x2x128xf32> to vector<2x128xf32>
    %cst_89 = arith.constant dense<0.000000e+00> : vector<2x128xf32>
    %259 = tpu.matmul %255, %205, %cst_89 {dimension_numbers = #tpu.dot_dimension_numbers<[1], [0], [0], [1], [0, 0, 1, 1], [], []>} : vector<2x32xf32>, vector<32x128xf32>, vector<2x128xf32> -> vector<2x128xf32>
    %260 = arith.addf %258, %259 : vector<2x128xf32>
    %261 = arith.negf %260 : vector<2x128xf32>
    %262 = math.exp %261 : vector<2x128xf32>
    %cst_90 = arith.constant 1.000000e+00 : f32
    %263 = vector.broadcast %cst_90 : f32 to vector<2x128xf32>
    %264 = arith.addf %263, %262 : vector<2x128xf32>
    %265 = arith.divf %263, %264 : vector<2x128xf32>
    %266 = math.tanh %260 : vector<2x128xf32>
    %267 = vector.extract_strided_slice %265 {offsets = [0, 0], sizes = [2, 32], strides = [1, 1]} : vector<2x128xf32> to vector<2x32xf32>
    %268 = vector.extract_strided_slice %265 {offsets = [0, 32], sizes = [2, 32], strides = [1, 1]} : vector<2x128xf32> to vector<2x32xf32>
    %269 = vector.extract_strided_slice %266 {offsets = [0, 64], sizes = [2, 32], strides = [1, 1]} : vector<2x128xf32> to vector<2x32xf32>
    %270 = vector.extract_strided_slice %265 {offsets = [0, 96], sizes = [2, 32], strides = [1, 1]} : vector<2x128xf32> to vector<2x32xf32>
    %271 = arith.mulf %268, %253 : vector<2x32xf32>
    %272 = arith.mulf %267, %269 : vector<2x32xf32>
    %273 = arith.addf %271, %272 : vector<2x32xf32>
    %274 = math.tanh %273 : vector<2x32xf32>
    %275 = arith.mulf %270, %274 : vector<2x32xf32>
    %c3_i32_91 = arith.constant 3 : i32
    %276 = arith.index_cast %c3_i32_91 : i32 to index
    %c0_92 = arith.constant 0 : index
    %c0_93 = arith.constant 0 : index
    %277 = vector.load %arg11[%276, %c0_92, %c0_93] : memref<8x2x128xf32, #tpu.memory_space<vmem>>, vector<1x2x128xf32>
    %278 = vector.shape_cast %277 : vector<1x2x128xf32> to vector<2x128xf32>
    %cst_94 = arith.constant dense<0.000000e+00> : vector<2x128xf32>
    %279 = tpu.matmul %275, %205, %cst_94 {dimension_numbers = #tpu.dot_dimension_numbers<[1], [0], [0], [1], [0, 0, 1, 1], [], []>} : vector<2x32xf32>, vector<32x128xf32>, vector<2x128xf32> -> vector<2x128xf32>
    %280 = arith.addf %278, %279 : vector<2x128xf32>
    %281 = arith.negf %280 : vector<2x128xf32>
    %282 = math.exp %281 : vector<2x128xf32>
    %cst_95 = arith.constant 1.000000e+00 : f32
    %283 = vector.broadcast %cst_95 : f32 to vector<2x128xf32>
    %284 = arith.addf %283, %282 : vector<2x128xf32>
    %285 = arith.divf %283, %284 : vector<2x128xf32>
    %286 = math.tanh %280 : vector<2x128xf32>
    %287 = vector.extract_strided_slice %285 {offsets = [0, 0], sizes = [2, 32], strides = [1, 1]} : vector<2x128xf32> to vector<2x32xf32>
    %288 = vector.extract_strided_slice %285 {offsets = [0, 32], sizes = [2, 32], strides = [1, 1]} : vector<2x128xf32> to vector<2x32xf32>
    %289 = vector.extract_strided_slice %286 {offsets = [0, 64], sizes = [2, 32], strides = [1, 1]} : vector<2x128xf32> to vector<2x32xf32>
    %290 = vector.extract_strided_slice %285 {offsets = [0, 96], sizes = [2, 32], strides = [1, 1]} : vector<2x128xf32> to vector<2x32xf32>
    %291 = arith.mulf %288, %273 : vector<2x32xf32>
    %292 = arith.mulf %287, %289 : vector<2x32xf32>
    %293 = arith.addf %291, %292 : vector<2x32xf32>
    %294 = math.tanh %293 : vector<2x32xf32>
    %295 = arith.mulf %290, %294 : vector<2x32xf32>
    %c4_i32_96 = arith.constant 4 : i32
    %296 = arith.index_cast %c4_i32_96 : i32 to index
    %c0_97 = arith.constant 0 : index
    %c0_98 = arith.constant 0 : index
    %297 = vector.load %arg11[%296, %c0_97, %c0_98] : memref<8x2x128xf32, #tpu.memory_space<vmem>>, vector<1x2x128xf32>
    %298 = vector.shape_cast %297 : vector<1x2x128xf32> to vector<2x128xf32>
    %cst_99 = arith.constant dense<0.000000e+00> : vector<2x128xf32>
    %299 = tpu.matmul %295, %205, %cst_99 {dimension_numbers = #tpu.dot_dimension_numbers<[1], [0], [0], [1], [0, 0, 1, 1], [], []>} : vector<2x32xf32>, vector<32x128xf32>, vector<2x128xf32> -> vector<2x128xf32>
    %300 = arith.addf %298, %299 : vector<2x128xf32>
    %301 = arith.negf %300 : vector<2x128xf32>
    %302 = math.exp %301 : vector<2x128xf32>
    %cst_100 = arith.constant 1.000000e+00 : f32
    %303 = vector.broadcast %cst_100 : f32 to vector<2x128xf32>
    %304 = arith.addf %303, %302 : vector<2x128xf32>
    %305 = arith.divf %303, %304 : vector<2x128xf32>
    %306 = math.tanh %300 : vector<2x128xf32>
    %307 = vector.extract_strided_slice %305 {offsets = [0, 0], sizes = [2, 32], strides = [1, 1]} : vector<2x128xf32> to vector<2x32xf32>
    %308 = vector.extract_strided_slice %305 {offsets = [0, 32], sizes = [2, 32], strides = [1, 1]} : vector<2x128xf32> to vector<2x32xf32>
    %309 = vector.extract_strided_slice %306 {offsets = [0, 64], sizes = [2, 32], strides = [1, 1]} : vector<2x128xf32> to vector<2x32xf32>
    %310 = vector.extract_strided_slice %305 {offsets = [0, 96], sizes = [2, 32], strides = [1, 1]} : vector<2x128xf32> to vector<2x32xf32>
    %311 = arith.mulf %308, %293 : vector<2x32xf32>
    %312 = arith.mulf %307, %309 : vector<2x32xf32>
    %313 = arith.addf %311, %312 : vector<2x32xf32>
    %314 = math.tanh %313 : vector<2x32xf32>
    %315 = arith.mulf %310, %314 : vector<2x32xf32>
    %c5_i32_101 = arith.constant 5 : i32
    %316 = arith.index_cast %c5_i32_101 : i32 to index
    %c0_102 = arith.constant 0 : index
    %c0_103 = arith.constant 0 : index
    %317 = vector.load %arg11[%316, %c0_102, %c0_103] : memref<8x2x128xf32, #tpu.memory_space<vmem>>, vector<1x2x128xf32>
    %318 = vector.shape_cast %317 : vector<1x2x128xf32> to vector<2x128xf32>
    %cst_104 = arith.constant dense<0.000000e+00> : vector<2x128xf32>
    %319 = tpu.matmul %315, %205, %cst_104 {dimension_numbers = #tpu.dot_dimension_numbers<[1], [0], [0], [1], [0, 0, 1, 1], [], []>} : vector<2x32xf32>, vector<32x128xf32>, vector<2x128xf32> -> vector<2x128xf32>
    %320 = arith.addf %318, %319 : vector<2x128xf32>
    %321 = arith.negf %320 : vector<2x128xf32>
    %322 = math.exp %321 : vector<2x128xf32>
    %cst_105 = arith.constant 1.000000e+00 : f32
    %323 = vector.broadcast %cst_105 : f32 to vector<2x128xf32>
    %324 = arith.addf %323, %322 : vector<2x128xf32>
    %325 = arith.divf %323, %324 : vector<2x128xf32>
    %326 = math.tanh %320 : vector<2x128xf32>
    %327 = vector.extract_strided_slice %325 {offsets = [0, 0], sizes = [2, 32], strides = [1, 1]} : vector<2x128xf32> to vector<2x32xf32>
    %328 = vector.extract_strided_slice %325 {offsets = [0, 32], sizes = [2, 32], strides = [1, 1]} : vector<2x128xf32> to vector<2x32xf32>
    %329 = vector.extract_strided_slice %326 {offsets = [0, 64], sizes = [2, 32], strides = [1, 1]} : vector<2x128xf32> to vector<2x32xf32>
    %330 = vector.extract_strided_slice %325 {offsets = [0, 96], sizes = [2, 32], strides = [1, 1]} : vector<2x128xf32> to vector<2x32xf32>
    %331 = arith.mulf %328, %313 : vector<2x32xf32>
    %332 = arith.mulf %327, %329 : vector<2x32xf32>
    %333 = arith.addf %331, %332 : vector<2x32xf32>
    %334 = math.tanh %333 : vector<2x32xf32>
    %335 = arith.mulf %330, %334 : vector<2x32xf32>
    %c6_i32_106 = arith.constant 6 : i32
    %336 = arith.index_cast %c6_i32_106 : i32 to index
    %c0_107 = arith.constant 0 : index
    %c0_108 = arith.constant 0 : index
    %337 = vector.load %arg11[%336, %c0_107, %c0_108] : memref<8x2x128xf32, #tpu.memory_space<vmem>>, vector<1x2x128xf32>
    %338 = vector.shape_cast %337 : vector<1x2x128xf32> to vector<2x128xf32>
    %cst_109 = arith.constant dense<0.000000e+00> : vector<2x128xf32>
    %339 = tpu.matmul %335, %205, %cst_109 {dimension_numbers = #tpu.dot_dimension_numbers<[1], [0], [0], [1], [0, 0, 1, 1], [], []>} : vector<2x32xf32>, vector<32x128xf32>, vector<2x128xf32> -> vector<2x128xf32>
    %340 = arith.addf %338, %339 : vector<2x128xf32>
    %341 = arith.negf %340 : vector<2x128xf32>
    %342 = math.exp %341 : vector<2x128xf32>
    %cst_110 = arith.constant 1.000000e+00 : f32
    %343 = vector.broadcast %cst_110 : f32 to vector<2x128xf32>
    %344 = arith.addf %343, %342 : vector<2x128xf32>
    %345 = arith.divf %343, %344 : vector<2x128xf32>
    %346 = math.tanh %340 : vector<2x128xf32>
    %347 = vector.extract_strided_slice %345 {offsets = [0, 0], sizes = [2, 32], strides = [1, 1]} : vector<2x128xf32> to vector<2x32xf32>
    %348 = vector.extract_strided_slice %345 {offsets = [0, 32], sizes = [2, 32], strides = [1, 1]} : vector<2x128xf32> to vector<2x32xf32>
    %349 = vector.extract_strided_slice %346 {offsets = [0, 64], sizes = [2, 32], strides = [1, 1]} : vector<2x128xf32> to vector<2x32xf32>
    %350 = vector.extract_strided_slice %345 {offsets = [0, 96], sizes = [2, 32], strides = [1, 1]} : vector<2x128xf32> to vector<2x32xf32>
    %351 = arith.mulf %348, %333 : vector<2x32xf32>
    %352 = arith.mulf %347, %349 : vector<2x32xf32>
    %353 = arith.addf %351, %352 : vector<2x32xf32>
    %354 = math.tanh %353 : vector<2x32xf32>
    %355 = arith.mulf %350, %354 : vector<2x32xf32>
    %c7_i32_111 = arith.constant 7 : i32
    %356 = arith.index_cast %c7_i32_111 : i32 to index
    %c0_112 = arith.constant 0 : index
    %c0_113 = arith.constant 0 : index
    %357 = vector.load %arg11[%356, %c0_112, %c0_113] : memref<8x2x128xf32, #tpu.memory_space<vmem>>, vector<1x2x128xf32>
    %358 = vector.shape_cast %357 : vector<1x2x128xf32> to vector<2x128xf32>
    %cst_114 = arith.constant dense<0.000000e+00> : vector<2x128xf32>
    %359 = tpu.matmul %355, %205, %cst_114 {dimension_numbers = #tpu.dot_dimension_numbers<[1], [0], [0], [1], [0, 0, 1, 1], [], []>} : vector<2x32xf32>, vector<32x128xf32>, vector<2x128xf32> -> vector<2x128xf32>
    %360 = arith.addf %358, %359 : vector<2x128xf32>
    %361 = arith.negf %360 : vector<2x128xf32>
    %362 = math.exp %361 : vector<2x128xf32>
    %cst_115 = arith.constant 1.000000e+00 : f32
    %363 = vector.broadcast %cst_115 : f32 to vector<2x128xf32>
    %364 = arith.addf %363, %362 : vector<2x128xf32>
    %365 = arith.divf %363, %364 : vector<2x128xf32>
    %366 = math.tanh %360 : vector<2x128xf32>
    %367 = vector.extract_strided_slice %365 {offsets = [0, 0], sizes = [2, 32], strides = [1, 1]} : vector<2x128xf32> to vector<2x32xf32>
    %368 = vector.extract_strided_slice %365 {offsets = [0, 32], sizes = [2, 32], strides = [1, 1]} : vector<2x128xf32> to vector<2x32xf32>
    %369 = vector.extract_strided_slice %366 {offsets = [0, 64], sizes = [2, 32], strides = [1, 1]} : vector<2x128xf32> to vector<2x32xf32>
    %370 = vector.extract_strided_slice %365 {offsets = [0, 96], sizes = [2, 32], strides = [1, 1]} : vector<2x128xf32> to vector<2x32xf32>
    %371 = arith.mulf %368, %353 : vector<2x32xf32>
    %372 = arith.mulf %367, %369 : vector<2x32xf32>
    %373 = arith.addf %371, %372 : vector<2x32xf32>
    %374 = math.tanh %373 : vector<2x32xf32>
    %375 = arith.mulf %370, %374 : vector<2x32xf32>
    %c8_i32_116 = arith.constant 8 : i32
    %c0_117 = arith.constant 0 : index
    %c0_118 = arith.constant 0 : index
    %376 = vector.load %arg7[%c0_117, %c0_118] : memref<32x10xf32, #tpu.memory_space<vmem>>, vector<32x10xf32>
    %cst_119 = arith.constant dense<0.000000e+00> : vector<2x10xf32>
    %377 = tpu.matmul %375, %376, %cst_119 {dimension_numbers = #tpu.dot_dimension_numbers<[1], [0], [0], [1], [0, 0, 1, 1], [], []>} : vector<2x32xf32>, vector<32x10xf32>, vector<2x10xf32> -> vector<2x10xf32>
    %c0_120 = arith.constant 0 : index
    %c0_121 = arith.constant 0 : index
    %378 = vector.load %arg8[%c0_120, %c0_121] : memref<1x10xf32, #tpu.memory_space<vmem>>, vector<1x10xf32>
    %379 = vector.broadcast %378 : vector<1x10xf32> to vector<2x10xf32>
    %380 = arith.addf %377, %379 : vector<2x10xf32>
    %c0_122 = arith.constant 0 : index
    %c0_123 = arith.constant 0 : index
    %381 = vector.load %arg9[%c0_122, %c0_123] : memref<2x10xf32, #tpu.memory_space<vmem>>, vector<2x10xf32>
    tpu.vector_store %arg9[%c0_122, %c0_123], %380 {strides = array<i32>} : memref<2x10xf32, #tpu.memory_space<vmem>>, vector<2x10xf32>,
    return
  }
}

</mosaic_0001>

<llo_original>
// kernel: lstm_forward.1
$region0: #{lstm_forward.1}
  #allocation0 [shape = 'u32[]', space=smem, size = 0x4, offset = 0x4, fixed_abs, tag = 'smem constant byte address 0x4 - core index']
  #allocation1 [shape = 'u32[144,128]{1,0:T(1,128)}', space=vmem, size = 0x12000, scoped, tag = 'internal scratch']
  #allocation2 [shape = 'f32[8,2,32]{2,1,0:T(2,128)}', space=vmem, size = 0x2000, scoped, tag = 'scratch operand']
  #allocation3 [shape = 'f32[8,2,128]{2,1,0:T(2,128)}', space=vmem, size = 0x2000, scoped, tag = 'scratch operand']
  %s0 = inlined_call_operand.vmem [shape: f32[8,2,16], index: 0, kind: input, shape index: {}]
  %s1 = inlined_call_operand.vmem [shape: f32[16,128], index: 1, kind: input, shape index: {}]
  %s2 = inlined_call_operand.vmem [shape: f32[32,128], index: 2, kind: input, shape index: {}]
  %s3 = inlined_call_operand.vmem [shape: f32[1,128], index: 3, kind: input, shape index: {}]
  %s4 = inlined_call_operand.vmem [shape: f32[32,128], index: 4, kind: input, shape index: {}]
  %s5 = inlined_call_operand.hbm [shape: f32[32,128], index: 5, kind: input, shape index: {}]
  %s6 = inlined_call_operand.vmem [shape: f32[1,128], index: 6, kind: input, shape index: {}]
  %s7 = inlined_call_operand.vmem [shape: f32[32,10], index: 7, kind: input, shape index: {}]
  %s8 = inlined_call_operand.hbm [shape: f32[1,10], index: 8, kind: input, shape index: {}]
  %s9 = inlined_call_operand.hbm [shape: f32[2,10], index: 9, kind: output, shape index: {}]
  %s10 = sld [smem:[#allocation0]]
  $region54: #{lstm_forward.1} parent=0
    _
  %s12 = ssub.s32 1, %s10
  %s13 = scalar_select 0, %s12, %s10
  $region1: #{lstm_forward.1} parent=0
    #allocation4 [shape = 'u8[16384]{0}', space=vmem, size = 0x4000, scoped, tag = 'input window, operand 5, single buffered']
    #allocation5 [shape = 's32[1]{0}', space=sflag, size = 0x4, scoped, tag = 'scoped memory for lstm_forward.1']
    #allocation6 [shape = 's32[1]{0}', space=sflag, size = 0x4, scoped, tag = 'scoped memory for lstm_forward.1']
    #allocation7 [shape = 'u8[512]{0}', space=vmem, size = 0x400, scoped, tag = 'input window, operand 8, single buffered']
    #allocation8 [shape = 's32[1]{0}', space=sflag, size = 0x4, scoped, tag = 'scoped memory for lstm_forward.1']
    #allocation9 [shape = 'u8[1024]{0}', space=vmem, size = 0x400, scoped, tag = 'output window, operand 0, single buffered']
    %14 = vsyncpa [#allocation5], 0
    %15 = vsyncpa [#allocation8], 0
    %16 = vsyncpa [#allocation6], 0
    // Predicated region
    $region2: #{lstm_forward.1} parent=1 // pred_check
      _
    $region3: #{lstm_forward.1} parent=1 // pred_check_branch
      %18 = sbr.rel (0) target = $region5
    $region4: #{lstm_forward.1} parent=1 // pred_region
      _
    $region5: #{lstm_forward.1} parent=1 // pred_fallthru
      _
    // Predicated region
    $region6: #{lstm_forward.1} parent=1 // pred_check
      _
    $region7: #{lstm_forward.1} parent=1 // pred_check_branch
      %20 = sbr.rel (0) target = $region9
    $region8: #{lstm_forward.1} parent=1 // pred_region
      _
    $region9: #{lstm_forward.1} parent=1 // pred_fallthru
      _
    // Predicated region
    $region10: #{lstm_forward.1} parent=1 // pred_check
      _
    $region11: #{lstm_forward.1} parent=1 // pred_check_branch
      %22 = sbr.rel (0) target = $region13
    $region12: #{lstm_forward.1} parent=1 // pred_region
      _
    $region13: #{lstm_forward.1} parent=1 // pred_fallthru
      _
    // Predicated region
    $region14: #{lstm_forward.1} parent=1 // pred_check
      _
    $region15: #{lstm_forward.1} parent=1 // pred_check_branch
      %24 = sbr.rel (0) target = $region17
    $region16: #{lstm_forward.1} parent=1 // pred_region
      _
    $region17: #{lstm_forward.1} parent=1 // pred_fallthru
      _
    // Predicated region
    $region18: #{lstm_forward.1} parent=1 // pred_check
      _
    $region19: #{lstm_forward.1} parent=1 // pred_check_branch
      %26 = sbr.rel (0) target = $region21
    $region20: #{lstm_forward.1} parent=1 // pred_region
      _
    $region21: #{lstm_forward.1} parent=1 // pred_fallthru
      _
    // Predicated region
    $region22: #{lstm_forward.1} parent=1 // pred_check
      _
    $region23: #{lstm_forward.1} parent=1 // pred_check_branch
      %28 = sbr.rel (0) target = $region25
    $region24: #{lstm_forward.1} parent=1 // pred_region
      %s30 = ssub.s32 512, 512
      %31 = vsyncadd [#allocation5], %s30
      %s32 = sshll.u32 [#allocation4], 4
      %s33 = int_to_ptr.vmem [resolvable:$true] %s32
      %38 = dma.hbm_to_vmem [thread:$0]  %s5, 512, %s33, [#allocation5], 128, 128, 8
    $region25: #{lstm_forward.1} parent=1 // pred_fallthru
      _
    // Predicated region
    $region26: #{lstm_forward.1} parent=1 // pred_check
      _
    $region27: #{lstm_forward.1} parent=1 // pred_check_branch
      %40 = sbr.rel (0) target = $region29
    $region28: #{lstm_forward.1} parent=1 // pred_region
      _
    $region29: #{lstm_forward.1} parent=1 // pred_fallthru
      _
    // Predicated region
    $region30: #{lstm_forward.1} parent=1 // pred_check
      _
    $region31: #{lstm_forward.1} parent=1 // pred_check_branch
      %42 = sbr.rel (0) target = $region33
    $region32: #{lstm_forward.1} parent=1 // pred_region
      _
    $region33: #{lstm_forward.1} parent=1 // pred_fallthru
      _
    // Predicated region
    $region34: #{lstm_forward.1} parent=1 // pred_check
      _
    $region35: #{lstm_forward.1} parent=1 // pred_check_branch
      %44 = sbr.rel (0) target = $region37
    $region36: #{lstm_forward.1} parent=1 // pred_region
      %s46 = ssub.s32 16, 16
      %47 = vsyncadd [#allocation8], %s46
      %s49 = sshll.u32 [#allocation7], 4
      %s50 = int_to_ptr.vmem [resolvable:$true] %s49
      %52 = dma.hbm_to_vmem [thread:$0]  %s8, 16, %s50, [#allocation8]
    $region37: #{lstm_forward.1} parent=1 // pred_fallthru
      _
    // Predicated region
    $region38: #{lstm_forward.1} parent=1 // pred_check
      _
    $region39: #{lstm_forward.1} parent=1 // pred_check_branch
      %54 = sbr.rel (0) target = $region41
    $region40: #{lstm_forward.1} parent=1 // pred_region
      %55 = dma.done [#allocation5], 512
    $region41: #{lstm_forward.1} parent=1 // pred_fallthru
      _
    // Predicated region
    $region42: #{lstm_forward.1} parent=1 // pred_check
      _
    $region43: #{lstm_forward.1} parent=1 // pred_check_branch
      %57 = sbr.rel (0) target = $region45
    $region44: #{lstm_forward.1} parent=1 // pred_region
      %58 = dma.done [#allocation8], 16
    $region45: #{lstm_forward.1} parent=1 // pred_fallthru
      _
    %v59 = vld [vmem:[%s1] sm:$0xff]
    %v60 = vld [vmem:[%s1 + $0x8] sm:$0xff]
    %v61 = vld [vmem:[%s2] sm:$0xff]
    %v62 = vld [vmem:[%s2 + $0x8] sm:$0xff]
    %v63 = vld [vmem:[%s2 + $0x10] sm:$0xff]
    %v64 = vld [vmem:[%s2 + $0x18] sm:$0xff]
    %v65 = vld [vmem:[%s3] sm:$0x1]
    %v66 = vld [vmem:[%s0] sm:$0x3]
    %v67 = vld [vmem:[%s0 + $0x2] sm:$0x3]
    %v68 = vld [vmem:[%s0 + $0x4] sm:$0x3]
    %v69 = vld [vmem:[%s0 + $0x6] sm:$0x3]
    %v70 = vld [vmem:[%s0 + $0x8] sm:$0x3]
    %v71 = vld [vmem:[%s0 + $0xa] sm:$0x3]
    %v72 = vld [vmem:[%s0 + $0xc] sm:$0x3]
    %v73 = vld [vmem:[%s0 + $0xe] sm:$0x3]
    %v75 = vlaneseq
    %v76 = vshrl.u32 %v75, 7
    %v77 = vsub.s32 0, %v76
    %v78 = vrot.slane %v65, %v77
    %v88 = vcombine.low %v66, %v67
    %v89 = vcombine.low %v68, %v69
    %v91 = vunpack.c.l.s4 1983009808
    %v92 = vunpack.c.0.s8 %v91
    %v93 = vlaneseq
    %v94 = vshrl.u32 %v93, 7
    %v95 = vsub.s32 %v92, %v94
    %v96 = vrot.slane %v88, %v95
    %v98 = vunpack.c.l.s4 1983009808
    %v99 = vunpack.c.0.s8 %v98
    %v100 = vlaneseq
    %v101 = vshrl.u32 %v100, 7
    %v102 = vsub.s32 %v99, %v101
    %v103 = vrot.slane %v89, %v102
    %v104 = vcombine.low %v96, %v103
    %v105 = vcombine.low %v70, %v71
    %v106 = vcombine.low %v72, %v73
    %v108 = vunpack.c.l.s4 1983009808
    %v109 = vunpack.c.0.s8 %v108
    %v110 = vlaneseq
    %v111 = vshrl.u32 %v110, 7
    %v112 = vsub.s32 %v109, %v111
    %v113 = vrot.slane %v105, %v112
    %v115 = vunpack.c.l.s4 1983009808
    %v116 = vunpack.c.0.s8 %v115
    %v117 = vlaneseq
    %v118 = vshrl.u32 %v117, 7
    %v119 = vsub.s32 %v116, %v118
    %v120 = vrot.slane %v106, %v119
    %v121 = vcombine.low %v113, %v120
    %vm122 = vcmask 130048
    %v123 = vsel %vm122, %v104, 0
    %v125 = vsel %vm122, %v121, 0
    %127 = vmatprep.subr.mxu0 0.0
    %128 = vmatpush1.msra.mxu0 0.0
    %129 = vmatprep.subr.mxu0 0.0
    %130 = vmatpush1.msra.mxu0 0.0
    %131 = vmatprep.subr.mxu0 0.0
    %132 = vmatpush1.msra.mxu0 0.0
    %133 = vmatprep.subr.mxu0 0.0
    %134 = vmatpush1.msra.mxu0 0.0
    %135 = vmatprep.subr.mxu0 0.0
    %136 = vmatpush1.msra.mxu0 0.0
    %137 = vmatprep.subr.mxu0 0.0
    %138 = vmatpush1.msra.mxu0 0.0
    %139 = vmatprep.subr.mxu0 0.0
    %140 = vmatpush1.msra.mxu0 0.0
    %141 = vmatprep.subr.mxu0 0.0
    %142 = vmatpush1.msra.mxu0 0.0
    %143 = vmatprep.subr.mxu0 0.0
    %144 = vmatpush1.msra.mxu0 0.0
    %145 = vmatprep.subr.mxu0 0.0
    %146 = vmatpush1.msra.mxu0 0.0
    %147 = vmatprep.subr.mxu0 0.0
    %148 = vmatpush1.msra.mxu0 0.0
    %149 = vmatprep.subr.mxu0 0.0
    %150 = vmatpush1.msra.mxu0 0.0
    %151 = vmatprep.subr.mxu0 0.0
    %152 = vmatpush1.msra.mxu0 0.0
    %153 = vmatprep.subr.mxu0 0.0
    %154 = vmatpush1.msra.mxu0 0.0
    %155 = vmatprep.subr.mxu0 0.0
    %156 = vmatpush1.msra.mxu0 %v60
    %157 = vmatprep.subr.mxu0 0.0
    %158 = vmatpush1.msra.mxu0 %v59
    %159 = vmatprep.subr.mxu0 0.0
    %160 = vmatpush2.msra.mxu0 0.0
    %161 = vmatprep.subr.mxu0 0.0
    %162 = vmatpush2.msra.mxu0 0.0
    %163 = vmatprep.subr.mxu0 0.0
    %164 = vmatpush2.msra.mxu0 0.0
    %165 = vmatprep.subr.mxu0 0.0
    %166 = vmatpush2.msra.mxu0 0.0
    %167 = vmatprep.subr.mxu0 0.0
    %168 = vmatpush2.msra.mxu0 0.0
    %169 = vmatprep.subr.mxu0 0.0
    %170 = vmatpush2.msra.mxu0 0.0
    %171 = vmatprep.subr.mxu0 0.0
    %172 = vmatpush2.msra.mxu0 0.0
    %173 = vmatprep.subr.mxu0 0.0
    %174 = vmatpush2.msra.mxu0 0.0
    %175 = vmatprep.subr.mxu0 0.0
    %176 = vmatpush2.msra.mxu0 0.0
    %177 = vmatprep.subr.mxu0 0.0
    %178 = vmatpush2.msra.mxu0 0.0
    %179 = vmatprep.subr.mxu0 0.0
    %180 = vmatpush2.msra.mxu0 0.0
    %181 = vmatprep.subr.mxu0 0.0
    %182 = vmatpush2.msra.mxu0 0.0
    %183 = vmatprep.subr.mxu0 0.0
    %184 = vmatpush2.msra.mxu0 0.0
    %185 = vmatprep.subr.mxu0 0.0
    %186 = vmatpush2.msra.mxu0 0.0
    %187 = vmatprep.subr.mxu0 0.0
    %188 = vmatpush2.msra.mxu0 0.0
    %189 = vmatprep.subr.mxu0 0.0
    %190 = vmatpush2.msra.mxu0 0.0
    %191 = vmatprep.mubr.f32.mxu0 0.0
    %192 = vmatmul.mubr.f32.gmra.mxu0 %v123
    %v193 = vpop.f32.mrf.mxu0
    %v194 = vadd.f32 %v78, %v193
    %v195 = vpop.f32.mrf.mxu0
    %196 = vmatprep.mubr.f32.mxu0 0.0
    %197 = vmatmul.mubr.f32.gmra.mxu0 %v125
    %v198 = vpop.f32.mrf.mxu0
    %v199 = vadd.f32 %v78, %v198
    %v200 = vpop.f32.mrf.mxu0
    %201 = vdwg.mxu0
    %v204 = vcombine.high %v194, %v194
    %v206 = vunpack.c.l.s4 1983009808
    %v207 = vunpack.c.0.s8 %v206
    %v208 = vlaneseq
    %v209 = vshrl.u32 %v208, 7
    %v210 = vsub.s32 %v207, %v209
    %v211 = vrot.slane %v194, %v210
    %v213 = vunpack.c.l.s4 1983009808
    %v214 = vunpack.c.0.s8 %v213
    %v215 = vlaneseq
    %v216 = vshrl.u32 %v215, 7
    %v217 = vsub.s32 %v214, %v216
    %v218 = vrot.slane %v204, %v217
    %v219 = vcombine.high %v211, %v211
    %v220 = vcombine.high %v218, %v218
    %v221 = vcombine.high %v199, %v199
    %v223 = vunpack.c.l.s4 1983009808
    %v224 = vunpack.c.0.s8 %v223
    %v225 = vlaneseq
    %v226 = vshrl.u32 %v225, 7
    %v227 = vsub.s32 %v224, %v226
    %v228 = vrot.slane %v199, %v227
    %v230 = vunpack.c.l.s4 1983009808
    %v231 = vunpack.c.0.s8 %v230
    %v232 = vlaneseq
    %v233 = vshrl.u32 %v232, 7
    %v234 = vsub.s32 %v231, %v233
    %v235 = vrot.slane %v221, %v234
    %v236 = vcombine.high %v228, %v228
    %v237 = vcombine.high %v235, %v235
    %246 = vst [vmem:[#allocation3] sm:$0x3] %v211
    %247 = vst [vmem:[#allocation3 + $0x2] sm:$0x3] %v219
    %248 = vst [vmem:[#allocation3 + $0x4] sm:$0x3] %v218
    %249 = vst [vmem:[#allocation3 + $0x6] sm:$0x3] %v220
    %250 = vst [vmem:[#allocation3 + $0x8] sm:$0x3] %v228
    %251 = vst [vmem:[#allocation3 + $0xa] sm:$0x3] %v236
    %252 = vst [vmem:[#allocation3 + $0xc] sm:$0x3] %v235
    %253 = vst [vmem:[#allocation3 + $0xe] sm:$0x3] %v237
    %v254 = vld [vmem:[#allocation3] sm:$0x3]
    %vm255 = vcmask 261120
    %v257 = vsel %vm255, 0.0, 0
    %259 = vmatprep.subr.mxu0 0.0
    %260 = vmatpush1.msra.mxu0 0.0
    %261 = vmatprep.subr.mxu0 0.0
    %262 = vmatpush1.msra.mxu0 0.0
    %263 = vmatprep.subr.mxu0 0.0
    %264 = vmatpush1.msra.mxu0 0.0
    %265 = vmatprep.subr.mxu0 0.0
    %266 = vmatpush1.msra.mxu0 0.0
    %267 = vmatprep.subr.mxu0 0.0
    %268 = vmatpush1.msra.mxu0 0.0
    %269 = vmatprep.subr.mxu0 0.0
    %270 = vmatpush1.msra.mxu0 0.0
    %271 = vmatprep.subr.mxu0 0.0
    %272 = vmatpush1.msra.mxu0 0.0
    %273 = vmatprep.subr.mxu0 0.0
    %274 = vmatpush1.msra.mxu0 0.0
    %275 = vmatprep.subr.mxu0 0.0
    %276 = vmatpush1.msra.mxu0 0.0
    %277 = vmatprep.subr.mxu0 0.0
    %278 = vmatpush1.msra.mxu0 0.0
    %279 = vmatprep.subr.mxu0 0.0
    %280 = vmatpush1.msra.mxu0 0.0
    %281 = vmatprep.subr.mxu0 0.0
    %282 = vmatpush1.msra.mxu0 0.0
    %283 = vmatprep.subr.mxu0 0.0
    %284 = vmatpush1.msra.mxu0 %v64
    %285 = vmatprep.subr.mxu0 0.0
    %286 = vmatpush1.msra.mxu0 %v63
    %287 = vmatprep.subr.mxu0 0.0
    %288 = vmatpush1.msra.mxu0 %v62
    %289 = vmatprep.subr.mxu0 0.0
    %290 = vmatpush1.msra.mxu0 %v61
    %291 = vmatprep.subr.mxu0 0.0
    %292 = vmatpush2.msra.mxu0 0.0
    %293 = vmatprep.subr.mxu0 0.0
    %294 = vmatpush2.msra.mxu0 0.0
    %295 = vmatprep.subr.mxu0 0.0
    %296 = vmatpush2.msra.mxu0 0.0
    %297 = vmatprep.subr.mxu0 0.0
    %298 = vmatpush2.msra.mxu0 0.0
    %299 = vmatprep.subr.mxu0 0.0
    %300 = vmatpush2.msra.mxu0 0.0
    %301 = vmatprep.subr.mxu0 0.0
    %302 = vmatpush2.msra.mxu0 0.0
    %303 = vmatprep.subr.mxu0 0.0
    %304 = vmatpush2.msra.mxu0 0.0
    %305 = vmatprep.subr.mxu0 0.0
    %306 = vmatpush2.msra.mxu0 0.0
    %307 = vmatprep.subr.mxu0 0.0
    %308 = vmatpush2.msra.mxu0 0.0
    %309 = vmatprep.subr.mxu0 0.0
    %310 = vmatpush2.msra.mxu0 0.0
    %311 = vmatprep.subr.mxu0 0.0
    %312 = vmatpush2.msra.mxu0 0.0
    %313 = vmatprep.subr.mxu0 0.0
    %314 = vmatpush2.msra.mxu0 0.0
    %315 = vmatprep.subr.mxu0 0.0
    %316 = vmatpush2.msra.mxu0 0.0
    %317 = vmatprep.subr.mxu0 0.0
    %318 = vmatpush2.msra.mxu0 0.0
    %319 = vmatprep.subr.mxu0 0.0
    %320 = vmatpush2.msra.mxu0 0.0
    %321 = vmatprep.subr.mxu0 0.0
    %322 = vmatpush2.msra.mxu0 0.0
    %323 = vmatprep.mubr.f32.mxu0 0.0
    %324 = vmatmul.mubr.f32.gmra.mxu0 %v257
    %v325 = vpop.f32.mrf.mxu0
    %v326 = vadd.f32 0.0, %v325
    %v327 = vpop.f32.mrf.mxu0
    %328 = vdwg.mxu0
    %v329 = vadd.f32 %v254, %v326
    %v330 = vxor.u32 %v329, 2147483648
    %v331 = vmul.f32 %v330, 1.442695
    %v332 = vpow.pop %v331
    %v333 = vadd.f32 %v332, 1.0
    %v334 = vrcp.pop %v333
    %v335 = vmul.f32 1.0, %v334
    %v336 = vtanh.pop %v329
    %v337 = vmul.f32 %v335, 0.0
    %339 = vrot.lane.b32.xlu0 %v336, 64
    %v340 = vpop.permute.xlu0 %339
    %v342 = vmul.f32 %v335, %v340
    %344 = vrot.lane.b32.xlu0 %v342, 32
    %v345 = vpop.permute.xlu0 %344
    %v347 = vadd.f32 %v337, %v345
    %v348 = vtanh.pop %v347
    %350 = vrot.lane.b32.xlu0 %v348, 64
    %v351 = vpop.permute.xlu0 %350
    %v353 = vmul.f32 %v335, %v351
    %355 = vrot.lane.b32.xlu0 %v353, 32
    %v356 = vpop.permute.xlu0 %355
    %vm358 = vcmask 254976
    %359 = vst.msk [vmem:[#allocation2] sm:$0x3] %vm358, %v356
    %s360 = scalar_lea.vmem [#allocation3], 2
    %v361 = vld [vmem:[%s360] sm:$0x3]
    %v362 = vsel %vm255, %v356, 0
    %364 = vmatprep.subr.mxu0 0.0
    %365 = vmatpush1.msra.mxu0 0.0
    %366 = vmatprep.subr.mxu0 0.0
    %367 = vmatpush1.msra.mxu0 0.0
    %368 = vmatprep.subr.mxu0 0.0
    %369 = vmatpush1.msra.mxu0 0.0
    %370 = vmatprep.subr.mxu0 0.0
    %371 = vmatpush1.msra.mxu0 0.0
    %372 = vmatprep.subr.mxu0 0.0
    %373 = vmatpush1.msra.mxu0 0.0
    %374 = vmatprep.subr.mxu0 0.0
    %375 = vmatpush1.msra.mxu0 0.0
    %376 = vmatprep.subr.mxu0 0.0
    %377 = vmatpush1.msra.mxu0 0.0
    %378 = vmatprep.subr.mxu0 0.0
    %379 = vmatpush1.msra.mxu0 0.0
    %380 = vmatprep.subr.mxu0 0.0
    %381 = vmatpush1.msra.mxu0 0.0
    %382 = vmatprep.subr.mxu0 0.0
    %383 = vmatpush1.msra.mxu0 0.0
    %384 = vmatprep.subr.mxu0 0.0
    %385 = vmatpush1.msra.mxu0 0.0
    %386 = vmatprep.subr.mxu0 0.0
    %387 = vmatpush1.msra.mxu0 0.0
    %388 = vmatprep.subr.mxu0 0.0
    %389 = vmatpush1.msra.mxu0 %v64
    %390 = vmatprep.subr.mxu0 0.0
    %391 = vmatpush1.msra.mxu0 %v63
    %392 = vmatprep.subr.mxu0 0.0
    %393 = vmatpush1.msra.mxu0 %v62
    %394 = vmatprep.subr.mxu0 0.0
    %395 = vmatpush1.msra.mxu0 %v61
    %396 = vmatprep.subr.mxu0 0.0
    %397 = vmatpush2.msra.mxu0 0.0
    %398 = vmatprep.subr.mxu0 0.0
    %399 = vmatpush2.msra.mxu0 0.0
    %400 = vmatprep.subr.mxu0 0.0
    %401 = vmatpush2.msra.mxu0 0.0
    %402 = vmatprep.subr.mxu0 0.0
    %403 = vmatpush2.msra.mxu0 0.0
    %404 = vmatprep.subr.mxu0 0.0
    %405 = vmatpush2.msra.mxu0 0.0
    %406 = vmatprep.subr.mxu0 0.0
    %407 = vmatpush2.msra.mxu0 0.0
    %408 = vmatprep.subr.mxu0 0.0
    %409 = vmatpush2.msra.mxu0 0.0
    %410 = vmatprep.subr.mxu0 0.0
    %411 = vmatpush2.msra.mxu0 0.0
    %412 = vmatprep.subr.mxu0 0.0
    %413 = vmatpush2.msra.mxu0 0.0
    %414 = vmatprep.subr.mxu0 0.0
    %415 = vmatpush2.msra.mxu0 0.0
    %416 = vmatprep.subr.mxu0 0.0
    %417 = vmatpush2.msra.mxu0 0.0
    %418 = vmatprep.subr.mxu0 0.0
    %419 = vmatpush2.msra.mxu0 0.0
    %420 = vmatprep.subr.mxu0 0.0
    %421 = vmatpush2.msra.mxu0 0.0
    %422 = vmatprep.subr.mxu0 0.0
    %423 = vmatpush2.msra.mxu0 0.0
    %424 = vmatprep.subr.mxu0 0.0
    %425 = vmatpush2.msra.mxu0 0.0
    %426 = vmatprep.subr.mxu0 0.0
    %427 = vmatpush2.msra.mxu0 0.0
    %428 = vmatprep.mubr.f32.mxu0 0.0
    %429 = vmatmul.mubr.f32.gmra.mxu0 %v362
    %v430 = vpop.f32.mrf.mxu0
    %v431 = vadd.f32 0.0, %v430
    %v432 = vpop.f32.mrf.mxu0
    %433 = vdwg.mxu0
    %v434 = vadd.f32 %v361, %v431
    %v435 = vxor.u32 %v434, 2147483648
    %v436 = vmul.f32 %v435, 1.442695
    %v437 = vpow.pop %v436
    %v438 = vadd.f32 %v437, 1.0
    %v439 = vrcp.pop %v438
    %v440 = vmul.f32 1.0, %v439
    %v441 = vtanh.pop %v434
    %v442 = vmul.f32 %v440, %v347
    %444 = vrot.lane.b32.xlu0 %v441, 64
    %v445 = vpop.permute.xlu0 %444
    %v447 = vmul.f32 %v440, %v445
    %449 = vrot.lane.b32.xlu0 %v447, 32
    %v450 = vpop.permute.xlu0 %449
    %v452 = vadd.f32 %v442, %v450
    %v453 = vtanh.pop %v452
    %455 = vrot.lane.b32.xlu0 %v453, 64
    %v456 = vpop.permute.xlu0 %455
    %v458 = vmul.f32 %v440, %v456
    %460 = vrot.lane.b32.xlu0 %v458, 32
    %v461 = vpop.permute.xlu0 %460
    %s463 = scalar_lea.vmem [#allocation2], 2
    %464 = vst.msk [vmem:[%s463] sm:$0x3] %vm358, %v461
    %s465 = scalar_lea.vmem [#allocation3], 4
    %v466 = vld [vmem:[%s465] sm:$0x3]
    %v467 = vsel %vm255, %v461, 0
    %469 = vmatprep.subr.mxu0 0.0
    %470 = vmatpush1.msra.mxu0 0.0
    %471 = vmatprep.subr.mxu0 0.0
    %472 = vmatpush1.msra.mxu0 0.0
    %473 = vmatprep.subr.mxu0 0.0
    %474 = vmatpush1.msra.mxu0 0.0
    %475 = vmatprep.subr.mxu0 0.0
    %476 = vmatpush1.msra.mxu0 0.0
    %477 = vmatprep.subr.mxu0 0.0
    %478 = vmatpush1.msra.mxu0 0.0
    %479 = vmatprep.subr.mxu0 0.0
    %480 = vmatpush1.msra.mxu0 0.0
    %481 = vmatprep.subr.mxu0 0.0
    %482 = vmatpush1.msra.mxu0 0.0
    %483 = vmatprep.subr.mxu0 0.0
    %484 = vmatpush1.msra.mxu0 0.0
    %485 = vmatprep.subr.mxu0 0.0
    %486 = vmatpush1.msra.mxu0 0.0
    %487 = vmatprep.subr.mxu0 0.0
    %488 = vmatpush1.msra.mxu0 0.0
    %489 = vmatprep.subr.mxu0 0.0
    %490 = vmatpush1.msra.mxu0 0.0
    %491 = vmatprep.subr.mxu0 0.0
    %492 = vmatpush1.msra.mxu0 0.0
    %493 = vmatprep.subr.mxu0 0.0
    %494 = vmatpush1.msra.mxu0 %v64
    %495 = vmatprep.subr.mxu0 0.0
    %496 = vmatpush1.msra.mxu0 %v63
    %497 = vmatprep.subr.mxu0 0.0
    %498 = vmatpush1.msra.mxu0 %v62
    %499 = vmatprep.subr.mxu0 0.0
    %500 = vmatpush1.msra.mxu0 %v61
    %501 = vmatprep.subr.mxu0 0.0
    %502 = vmatpush2.msra.mxu0 0.0
    %503 = vmatprep.subr.mxu0 0.0
    %504 = vmatpush2.msra.mxu0 0.0
    %505 = vmatprep.subr.mxu0 0.0
    %506 = vmatpush2.msra.mxu0 0.0
    %507 = vmatprep.subr.mxu0 0.0
    %508 = vmatpush2.msra.mxu0 0.0
    %509 = vmatprep.subr.mxu0 0.0
    %510 = vmatpush2.msra.mxu0 0.0
    %511 = vmatprep.subr.mxu0 0.0
    %512 = vmatpush2.msra.mxu0 0.0
    %513 = vmatprep.subr.mxu0 0.0
    %514 = vmatpush2.msra.mxu0 0.0
    %515 = vmatprep.subr.mxu0 0.0
    %516 = vmatpush2.msra.mxu0 0.0
    %517 = vmatprep.subr.mxu0 0.0
    %518 = vmatpush2.msra.mxu0 0.0
    %519 = vmatprep.subr.mxu0 0.0
    %520 = vmatpush2.msra.mxu0 0.0
    %521 = vmatprep.subr.mxu0 0.0
    %522 = vmatpush2.msra.mxu0 0.0
    %523 = vmatprep.subr.mxu0 0.0
    %524 = vmatpush2.msra.mxu0 0.0
    %525 = vmatprep.subr.mxu0 0.0
    %526 = vmatpush2.msra.mxu0 0.0
    %527 = vmatprep.subr.mxu0 0.0
    %528 = vmatpush2.msra.mxu0 0.0
    %529 = vmatprep.subr.mxu0 0.0
    %530 = vmatpush2.msra.mxu0 0.0
    %531 = vmatprep.subr.mxu0 0.0
    %532 = vmatpush2.msra.mxu0 0.0
    %533 = vmatprep.mubr.f32.mxu0 0.0
    %534 = vmatmul.mubr.f32.gmra.mxu0 %v467
    %v535 = vpop.f32.mrf.mxu0
    %v536 = vadd.f32 0.0, %v535
    %v537 = vpop.f32.mrf.mxu0
    %538 = vdwg.mxu0
    %v539 = vadd.f32 %v466, %v536
    %v540 = vxor.u32 %v539, 2147483648
    %v541 = vmul.f32 %v540, 1.442695
    %v542 = vpow.pop %v541
    %v543 = vadd.f32 %v542, 1.0
    %v544 = vrcp.pop %v543
    %v545 = vmul.f32 1.0, %v544
    %v546 = vtanh.pop %v539
    %v547 = vmul.f32 %v545, %v452
    %549 = vrot.lane.b32.xlu0 %v546, 64
    %v550 = vpop.permute.xlu0 %549
    %v552 = vmul.f32 %v545, %v550
    %554 = vrot.lane.b32.xlu0 %v552, 32
    %v555 = vpop.permute.xlu0 %554
    %v557 = vadd.f32 %v547, %v555
    %v558 = vtanh.pop %v557
    %560 = vrot.lane.b32.xlu0 %v558, 64
    %v561 = vpop.permute.xlu0 %560
    %v563 = vmul.f32 %v545, %v561
    %565 = vrot.lane.b32.xlu0 %v563, 32
    %v566 = vpop.permute.xlu0 %565
    %s568 = scalar_lea.vmem [#allocation2], 4
    %569 = vst.msk [vmem:[%s568] sm:$0x3] %vm358, %v566
    %s570 = scalar_lea.vmem [#allocation3], 6
    %v571 = vld [vmem:[%s570] sm:$0x3]
    %v572 = vsel %vm255, %v566, 0
    %574 = vmatprep.subr.mxu0 0.0
    %575 = vmatpush1.msra.mxu0 0.0
    %576 = vmatprep.subr.mxu0 0.0
    %577 = vmatpush1.msra.mxu0 0.0
    %578 = vmatprep.subr.mxu0 0.0
    %579 = vmatpush1.msra.mxu0 0.0
    %580 = vmatprep.subr.mxu0 0.0
    %581 = vmatpush1.msra.mxu0 0.0
    %582 = vmatprep.subr.mxu0 0.0
    %583 = vmatpush1.msra.mxu0 0.0
    %584 = vmatprep.subr.mxu0 0.0
    %585 = vmatpush1.msra.mxu0 0.0
    %586 = vmatprep.subr.mxu0 0.0
    %587 = vmatpush1.msra.mxu0 0.0
    %588 = vmatprep.subr.mxu0 0.0
    %589 = vmatpush1.msra.mxu0 0.0
    %590 = vmatprep.subr.mxu0 0.0
    %591 = vmatpush1.msra.mxu0 0.0
    %592 = vmatprep.subr.mxu0 0.0
    %593 = vmatpush1.msra.mxu0 0.0
    %594 = vmatprep.subr.mxu0 0.0
    %595 = vmatpush1.msra.mxu0 0.0
    %596 = vmatprep.subr.mxu0 0.0
    %597 = vmatpush1.msra.mxu0 0.0
    %598 = vmatprep.subr.mxu0 0.0
    %599 = vmatpush1.msra.mxu0 %v64
    %600 = vmatprep.subr.mxu0 0.0
    %601 = vmatpush1.msra.mxu0 %v63
    %602 = vmatprep.subr.mxu0 0.0
    %603 = vmatpush1.msra.mxu0 %v62
    %604 = vmatprep.subr.mxu0 0.0
    %605 = vmatpush1.msra.mxu0 %v61
    %606 = vmatprep.subr.mxu0 0.0
    %607 = vmatpush2.msra.mxu0 0.0
    %608 = vmatprep.subr.mxu0 0.0
    %609 = vmatpush2.msra.mxu0 0.0
    %610 = vmatprep.subr.mxu0 0.0
    %611 = vmatpush2.msra.mxu0 0.0
    %612 = vmatprep.subr.mxu0 0.0
    %613 = vmatpush2.msra.mxu0 0.0
    %614 = vmatprep.subr.mxu0 0.0
    %615 = vmatpush2.msra.mxu0 0.0
    %616 = vmatprep.subr.mxu0 0.0
    %617 = vmatpush2.msra.mxu0 0.0
    %618 = vmatprep.subr.mxu0 0.0
    %619 = vmatpush2.msra.mxu0 0.0
    %620 = vmatprep.subr.mxu0 0.0
    %621 = vmatpush2.msra.mxu0 0.0
    %622 = vmatprep.subr.mxu0 0.0
    %623 = vmatpush2.msra.mxu0 0.0
    %624 = vmatprep.subr.mxu0 0.0
    %625 = vmatpush2.msra.mxu0 0.0
    %626 = vmatprep.subr.mxu0 0.0
    %627 = vmatpush2.msra.mxu0 0.0
    %628 = vmatprep.subr.mxu0 0.0
    %629 = vmatpush2.msra.mxu0 0.0
    %630 = vmatprep.subr.mxu0 0.0
    %631 = vmatpush2.msra.mxu0 0.0
    %632 = vmatprep.subr.mxu0 0.0
    %633 = vmatpush2.msra.mxu0 0.0
    %634 = vmatprep.subr.mxu0 0.0
    %635 = vmatpush2.msra.mxu0 0.0
    %636 = vmatprep.subr.mxu0 0.0
    %637 = vmatpush2.msra.mxu0 0.0
    %638 = vmatprep.mubr.f32.mxu0 0.0
    %639 = vmatmul.mubr.f32.gmra.mxu0 %v572
    %v640 = vpop.f32.mrf.mxu0
    %v641 = vadd.f32 0.0, %v640
    %v642 = vpop.f32.mrf.mxu0
    %643 = vdwg.mxu0
    %v644 = vadd.f32 %v571, %v641
    %v645 = vxor.u32 %v644, 2147483648
    %v646 = vmul.f32 %v645, 1.442695
    %v647 = vpow.pop %v646
    %v648 = vadd.f32 %v647, 1.0
    %v649 = vrcp.pop %v648
    %v650 = vmul.f32 1.0, %v649
    %v651 = vtanh.pop %v644
    %v652 = vmul.f32 %v650, %v557
    %654 = vrot.lane.b32.xlu0 %v651, 64
    %v655 = vpop.permute.xlu0 %654
    %v657 = vmul.f32 %v650, %v655
    %659 = vrot.lane.b32.xlu0 %v657, 32
    %v660 = vpop.permute.xlu0 %659
    %v662 = vadd.f32 %v652, %v660
    %v663 = vtanh.pop %v662
    %665 = vrot.lane.b32.xlu0 %v663, 64
    %v666 = vpop.permute.xlu0 %665
    %v668 = vmul.f32 %v650, %v666
    %670 = vrot.lane.b32.xlu0 %v668, 32
    %v671 = vpop.permute.xlu0 %670
    %s673 = scalar_lea.vmem [#allocation2], 6
    %674 = vst.msk [vmem:[%s673] sm:$0x3] %vm358, %v671
    %s675 = scalar_lea.vmem [#allocation3], 8
    %v676 = vld [vmem:[%s675] sm:$0x3]
    %v677 = vsel %vm255, %v671, 0
    %679 = vmatprep.subr.mxu0 0.0
    %680 = vmatpush1.msra.mxu0 0.0
    %681 = vmatprep.subr.mxu0 0.0
    %682 = vmatpush1.msra.mxu0 0.0
    %683 = vmatprep.subr.mxu0 0.0
    %684 = vmatpush1.msra.mxu0 0.0
    %685 = vmatprep.subr.mxu0 0.0
    %686 = vmatpush1.msra.mxu0 0.0
    %687 = vmatprep.subr.mxu0 0.0
    %688 = vmatpush1.msra.mxu0 0.0
    %689 = vmatprep.subr.mxu0 0.0
    %690 = vmatpush1.msra.mxu0 0.0
    %691 = vmatprep.subr.mxu0 0.0
    %692 = vmatpush1.msra.mxu0 0.0
    %693 = vmatprep.subr.mxu0 0.0
    %694 = vmatpush1.msra.mxu0 0.0
    %695 = vmatprep.subr.mxu0 0.0
    %696 = vmatpush1.msra.mxu0 0.0
    %697 = vmatprep.subr.mxu0 0.0
    %698 = vmatpush1.msra.mxu0 0.0
    %699 = vmatprep.subr.mxu0 0.0
    %700 = vmatpush1.msra.mxu0 0.0
    %701 = vmatprep.subr.mxu0 0.0
    %702 = vmatpush1.msra.mxu0 0.0
    %703 = vmatprep.subr.mxu0 0.0
    %704 = vmatpush1.msra.mxu0 %v64
    %705 = vmatprep.subr.mxu0 0.0
    %706 = vmatpush1.msra.mxu0 %v63
    %707 = vmatprep.subr.mxu0 0.0
    %708 = vmatpush1.msra.mxu0 %v62
    %709 = vmatprep.subr.mxu0 0.0
    %710 = vmatpush1.msra.mxu0 %v61
    %711 = vmatprep.subr.mxu0 0.0
    %712 = vmatpush2.msra.mxu0 0.0
    %713 = vmatprep.subr.mxu0 0.0
    %714 = vmatpush2.msra.mxu0 0.0
    %715 = vmatprep.subr.mxu0 0.0
    %716 = vmatpush2.msra.mxu0 0.0
    %717 = vmatprep.subr.mxu0 0.0
    %718 = vmatpush2.msra.mxu0 0.0
    %719 = vmatprep.subr.mxu0 0.0
    %720 = vmatpush2.msra.mxu0 0.0
    %721 = vmatprep.subr.mxu0 0.0
    %722 = vmatpush2.msra.mxu0 0.0
    %723 = vmatprep.subr.mxu0 0.0
    %724 = vmatpush2.msra.mxu0 0.0
    %725 = vmatprep.subr.mxu0 0.0
    %726 = vmatpush2.msra.mxu0 0.0
    %727 = vmatprep.subr.mxu0 0.0
    %728 = vmatpush2.msra.mxu0 0.0
    %729 = vmatprep.subr.mxu0 0.0
    %730 = vmatpush2.msra.mxu0 0.0
    %731 = vmatprep.subr.mxu0 0.0
    %732 = vmatpush2.msra.mxu0 0.0
    %733 = vmatprep.subr.mxu0 0.0
    %734 = vmatpush2.msra.mxu0 0.0
    %735 = vmatprep.subr.mxu0 0.0
    %736 = vmatpush2.msra.mxu0 0.0
    %737 = vmatprep.subr.mxu0 0.0
    %738 = vmatpush2.msra.mxu0 0.0
    %739 = vmatprep.subr.mxu0 0.0
    %740 = vmatpush2.msra.mxu0 0.0
    %741 = vmatprep.subr.mxu0 0.0
    %742 = vmatpush2.msra.mxu0 0.0
    %743 = vmatprep.mubr.f32.mxu0 0.0
    %744 = vmatmul.mubr.f32.gmra.mxu0 %v677
    %v745 = vpop.f32.mrf.mxu0
    %v746 = vadd.f32 0.0, %v745
    %v747 = vpop.f32.mrf.mxu0
    %748 = vdwg.mxu0
    %v749 = vadd.f32 %v676, %v746
    %v750 = vxor.u32 %v749, 2147483648
    %v751 = vmul.f32 %v750, 1.442695
    %v752 = vpow.pop %v751
    %v753 = vadd.f32 %v752, 1.0
    %v754 = vrcp.pop %v753
    %v755 = vmul.f32 1.0, %v754
    %v756 = vtanh.pop %v749
    %v757 = vmul.f32 %v755, %v662
    %759 = vrot.lane.b32.xlu0 %v756, 64
    %v760 = vpop.permute.xlu0 %759
    %v762 = vmul.f32 %v755, %v760
    %764 = vrot.lane.b32.xlu0 %v762, 32
    %v765 = vpop.permute.xlu0 %764
    %v767 = vadd.f32 %v757, %v765
    %v768 = vtanh.pop %v767
    %770 = vrot.lane.b32.xlu0 %v768, 64
    %v771 = vpop.permute.xlu0 %770
    %v773 = vmul.f32 %v755, %v771
    %775 = vrot.lane.b32.xlu0 %v773, 32
    %v776 = vpop.permute.xlu0 %775
    %s778 = scalar_lea.vmem [#allocation2], 8
    %779 = vst.msk [vmem:[%s778] sm:$0x3] %vm358, %v776
    %s780 = scalar_lea.vmem [#allocation3], 10
    %v781 = vld [vmem:[%s780] sm:$0x3]
    %v782 = vsel %vm255, %v776, 0
    %784 = vmatprep.subr.mxu0 0.0
    %785 = vmatpush1.msra.mxu0 0.0
    %786 = vmatprep.subr.mxu0 0.0
    %787 = vmatpush1.msra.mxu0 0.0
    %788 = vmatprep.subr.mxu0 0.0
    %789 = vmatpush1.msra.mxu0 0.0
    %790 = vmatprep.subr.mxu0 0.0
    %791 = vmatpush1.msra.mxu0 0.0
    %792 = vmatprep.subr.mxu0 0.0
    %793 = vmatpush1.msra.mxu0 0.0
    %794 = vmatprep.subr.mxu0 0.0
    %795 = vmatpush1.msra.mxu0 0.0
    %796 = vmatprep.subr.mxu0 0.0
    %797 = vmatpush1.msra.mxu0 0.0
    %798 = vmatprep.subr.mxu0 0.0
    %799 = vmatpush1.msra.mxu0 0.0
    %800 = vmatprep.subr.mxu0 0.0
    %801 = vmatpush1.msra.mxu0 0.0
    %802 = vmatprep.subr.mxu0 0.0
    %803 = vmatpush1.msra.mxu0 0.0
    %804 = vmatprep.subr.mxu0 0.0
    %805 = vmatpush1.msra.mxu0 0.0
    %806 = vmatprep.subr.mxu0 0.0
    %807 = vmatpush1.msra.mxu0 0.0
    %808 = vmatprep.subr.mxu0 0.0
    %809 = vmatpush1.msra.mxu0 %v64
    %810 = vmatprep.subr.mxu0 0.0
    %811 = vmatpush1.msra.mxu0 %v63
    %812 = vmatprep.subr.mxu0 0.0
    %813 = vmatpush1.msra.mxu0 %v62
    %814 = vmatprep.subr.mxu0 0.0
    %815 = vmatpush1.msra.mxu0 %v61
    %816 = vmatprep.subr.mxu0 0.0
    %817 = vmatpush2.msra.mxu0 0.0
    %818 = vmatprep.subr.mxu0 0.0
    %819 = vmatpush2.msra.mxu0 0.0
    %820 = vmatprep.subr.mxu0 0.0
    %821 = vmatpush2.msra.mxu0 0.0
    %822 = vmatprep.subr.mxu0 0.0
    %823 = vmatpush2.msra.mxu0 0.0
    %824 = vmatprep.subr.mxu0 0.0
    %825 = vmatpush2.msra.mxu0 0.0
    %826 = vmatprep.subr.mxu0 0.0
    %827 = vmatpush2.msra.mxu0 0.0
    %828 = vmatprep.subr.mxu0 0.0
    %829 = vmatpush2.msra.mxu0 0.0
    %830 = vmatprep.subr.mxu0 0.0
    %831 = vmatpush2.msra.mxu0 0.0
    %832 = vmatprep.subr.mxu0 0.0
    %833 = vmatpush2.msra.mxu0 0.0
    %834 = vmatprep.subr.mxu0 0.0
    %835 = vmatpush2.msra.mxu0 0.0
    %836 = vmatprep.subr.mxu0 0.0
    %837 = vmatpush2.msra.mxu0 0.0
    %838 = vmatprep.subr.mxu0 0.0
    %839 = vmatpush2.msra.mxu0 0.0
    %840 = vmatprep.subr.mxu0 0.0
    %841 = vmatpush2.msra.mxu0 0.0
    %842 = vmatprep.subr.mxu0 0.0
    %843 = vmatpush2.msra.mxu0 0.0
    %844 = vmatprep.subr.mxu0 0.0
    %845 = vmatpush2.msra.mxu0 0.0
    %846 = vmatprep.subr.mxu0 0.0
    %847 = vmatpush2.msra.mxu0 0.0
    %848 = vmatprep.mubr.f32.mxu0 0.0
    %849 = vmatmul.mubr.f32.gmra.mxu0 %v782
    %v850 = vpop.f32.mrf.mxu0
    %v851 = vadd.f32 0.0, %v850
    %v852 = vpop.f32.mrf.mxu0
    %853 = vdwg.mxu0
    %v854 = vadd.f32 %v781, %v851
    %v855 = vxor.u32 %v854, 2147483648
    %v856 = vmul.f32 %v855, 1.442695
    %v857 = vpow.pop %v856
    %v858 = vadd.f32 %v857, 1.0
    %v859 = vrcp.pop %v858
    %v860 = vmul.f32 1.0, %v859
    %v861 = vtanh.pop %v854
    %v862 = vmul.f32 %v860, %v767
    %864 = vrot.lane.b32.xlu0 %v861, 64
    %v865 = vpop.permute.xlu0 %864
    %v867 = vmul.f32 %v860, %v865
    %869 = vrot.lane.b32.xlu0 %v867, 32
    %v870 = vpop.permute.xlu0 %869
    %v872 = vadd.f32 %v862, %v870
    %v873 = vtanh.pop %v872
    %875 = vrot.lane.b32.xlu0 %v873, 64
    %v876 = vpop.permute.xlu0 %875
    %v878 = vmul.f32 %v860, %v876
    %880 = vrot.lane.b32.xlu0 %v878, 32
    %v881 = vpop.permute.xlu0 %880
    %s883 = scalar_lea.vmem [#allocation2], 10
    %884 = vst.msk [vmem:[%s883] sm:$0x3] %vm358, %v881
    %s885 = scalar_lea.vmem [#allocation3], 12
    %v886 = vld [vmem:[%s885] sm:$0x3]
    %v887 = vsel %vm255, %v881, 0
    %889 = vmatprep.subr.mxu0 0.0
    %890 = vmatpush1.msra.mxu0 0.0
    %891 = vmatprep.subr.mxu0 0.0
    %892 = vmatpush1.msra.mxu0 0.0
    %893 = vmatprep.subr.mxu0 0.0
    %894 = vmatpush1.msra.mxu0 0.0
    %895 = vmatprep.subr.mxu0 0.0
    %896 = vmatpush1.msra.mxu0 0.0
    %897 = vmatprep.subr.mxu0 0.0
    %898 = vmatpush1.msra.mxu0 0.0
    %899 = vmatprep.subr.mxu0 0.0
    %900 = vmatpush1.msra.mxu0 0.0
    %901 = vmatprep.subr.mxu0 0.0
    %902 = vmatpush1.msra.mxu0 0.0
    %903 = vmatprep.subr.mxu0 0.0
    %904 = vmatpush1.msra.mxu0 0.0
    %905 = vmatprep.subr.mxu0 0.0
    %906 = vmatpush1.msra.mxu0 0.0
    %907 = vmatprep.subr.mxu0 0.0
    %908 = vmatpush1.msra.mxu0 0.0
    %909 = vmatprep.subr.mxu0 0.0
    %910 = vmatpush1.msra.mxu0 0.0
    %911 = vmatprep.subr.mxu0 0.0
    %912 = vmatpush1.msra.mxu0 0.0
    %913 = vmatprep.subr.mxu0 0.0
    %914 = vmatpush1.msra.mxu0 %v64
    %915 = vmatprep.subr.mxu0 0.0
    %916 = vmatpush1.msra.mxu0 %v63
    %917 = vmatprep.subr.mxu0 0.0
    %918 = vmatpush1.msra.mxu0 %v62
    %919 = vmatprep.subr.mxu0 0.0
    %920 = vmatpush1.msra.mxu0 %v61
    %921 = vmatprep.subr.mxu0 0.0
    %922 = vmatpush2.msra.mxu0 0.0
    %923 = vmatprep.subr.mxu0 0.0
    %924 = vmatpush2.msra.mxu0 0.0
    %925 = vmatprep.subr.mxu0 0.0
    %926 = vmatpush2.msra.mxu0 0.0
    %927 = vmatprep.subr.mxu0 0.0
    %928 = vmatpush2.msra.mxu0 0.0
    %929 = vmatprep.subr.mxu0 0.0
    %930 = vmatpush2.msra.mxu0 0.0
    %931 = vmatprep.subr.mxu0 0.0
    %932 = vmatpush2.msra.mxu0 0.0
    %933 = vmatprep.subr.mxu0 0.0
    %934 = vmatpush2.msra.mxu0 0.0
    %935 = vmatprep.subr.mxu0 0.0
    %936 = vmatpush2.msra.mxu0 0.0
    %937 = vmatprep.subr.mxu0 0.0
    %938 = vmatpush2.msra.mxu0 0.0
    %939 = vmatprep.subr.mxu0 0.0
    %940 = vmatpush2.msra.mxu0 0.0
    %941 = vmatprep.subr.mxu0 0.0
    %942 = vmatpush2.msra.mxu0 0.0
    %943 = vmatprep.subr.mxu0 0.0
    %944 = vmatpush2.msra.mxu0 0.0
    %945 = vmatprep.subr.mxu0 0.0
    %946 = vmatpush2.msra.mxu0 0.0
    %947 = vmatprep.subr.mxu0 0.0
    %948 = vmatpush2.msra.mxu0 0.0
    %949 = vmatprep.subr.mxu0 0.0
    %950 = vmatpush2.msra.mxu0 0.0
    %951 = vmatprep.subr.mxu0 0.0
    %952 = vmatpush2.msra.mxu0 0.0
    %953 = vmatprep.mubr.f32.mxu0 0.0
    %954 = vmatmul.mubr.f32.gmra.mxu0 %v887
    %v955 = vpop.f32.mrf.mxu0
    %v956 = vadd.f32 0.0, %v955
    %v957 = vpop.f32.mrf.mxu0
    %958 = vdwg.mxu0
    %v959 = vadd.f32 %v886, %v956
    %v960 = vxor.u32 %v959, 2147483648
    %v961 = vmul.f32 %v960, 1.442695
    %v962 = vpow.pop %v961
    %v963 = vadd.f32 %v962, 1.0
    %v964 = vrcp.pop %v963
    %v965 = vmul.f32 1.0, %v964
    %v966 = vtanh.pop %v959
    %v967 = vmul.f32 %v965, %v872
    %969 = vrot.lane.b32.xlu0 %v966, 64
    %v970 = vpop.permute.xlu0 %969
    %v972 = vmul.f32 %v965, %v970
    %974 = vrot.lane.b32.xlu0 %v972, 32
    %v975 = vpop.permute.xlu0 %974
    %v977 = vadd.f32 %v967, %v975
    %v978 = vtanh.pop %v977
    %980 = vrot.lane.b32.xlu0 %v978, 64
    %v981 = vpop.permute.xlu0 %980
    %v983 = vmul.f32 %v965, %v981
    %985 = vrot.lane.b32.xlu0 %v983, 32
    %v986 = vpop.permute.xlu0 %985
    %s988 = scalar_lea.vmem [#allocation2], 12
    %989 = vst.msk [vmem:[%s988] sm:$0x3] %vm358, %v986
    %s990 = scalar_lea.vmem [#allocation3], 14
    %v991 = vld [vmem:[%s990] sm:$0x3]
    %v992 = vsel %vm255, %v986, 0
    %994 = vmatprep.subr.mxu0 0.0
    %995 = vmatpush1.msra.mxu0 0.0
    %996 = vmatprep.subr.mxu0 0.0
    %997 = vmatpush1.msra.mxu0 0.0
    %998 = vmatprep.subr.mxu0 0.0
    %999 = vmatpush1.msra.mxu0 0.0
    %1000 = vmatprep.subr.mxu0 0.0
    %1001 = vmatpush1.msra.mxu0 0.0
    %1002 = vmatprep.subr.mxu0 0.0
    %1003 = vmatpush1.msra.mxu0 0.0
    %1004 = vmatprep.subr.mxu0 0.0
    %1005 = vmatpush1.msra.mxu0 0.0
    %1006 = vmatprep.subr.mxu0 0.0
    %1007 = vmatpush1.msra.mxu0 0.0
    %1008 = vmatprep.subr.mxu0 0.0
    %1009 = vmatpush1.msra.mxu0 0.0
    %1010 = vmatprep.subr.mxu0 0.0
    %1011 = vmatpush1.msra.mxu0 0.0
    %1012 = vmatprep.subr.mxu0 0.0
    %1013 = vmatpush1.msra.mxu0 0.0
    %1014 = vmatprep.subr.mxu0 0.0
    %1015 = vmatpush1.msra.mxu0 0.0
    %1016 = vmatprep.subr.mxu0 0.0
    %1017 = vmatpush1.msra.mxu0 0.0
    %1018 = vmatprep.subr.mxu0 0.0
    %1019 = vmatpush1.msra.mxu0 %v64
    %1020 = vmatprep.subr.mxu0 0.0
    %1021 = vmatpush1.msra.mxu0 %v63
    %1022 = vmatprep.subr.mxu0 0.0
    %1023 = vmatpush1.msra.mxu0 %v62
    %1024 = vmatprep.subr.mxu0 0.0
    %1025 = vmatpush1.msra.mxu0 %v61
    %1026 = vmatprep.subr.mxu0 0.0
    %1027 = vmatpush2.msra.mxu0 0.0
    %1028 = vmatprep.subr.mxu0 0.0
    %1029 = vmatpush2.msra.mxu0 0.0
    %1030 = vmatprep.subr.mxu0 0.0
    %1031 = vmatpush2.msra.mxu0 0.0
    %1032 = vmatprep.subr.mxu0 0.0
    %1033 = vmatpush2.msra.mxu0 0.0
    %1034 = vmatprep.subr.mxu0 0.0
    %1035 = vmatpush2.msra.mxu0 0.0
    %1036 = vmatprep.subr.mxu0 0.0
    %1037 = vmatpush2.msra.mxu0 0.0
    %1038 = vmatprep.subr.mxu0 0.0
    %1039 = vmatpush2.msra.mxu0 0.0
    %1040 = vmatprep.subr.mxu0 0.0
    %1041 = vmatpush2.msra.mxu0 0.0
    %1042 = vmatprep.subr.mxu0 0.0
    %1043 = vmatpush2.msra.mxu0 0.0
    %1044 = vmatprep.subr.mxu0 0.0
    %1045 = vmatpush2.msra.mxu0 0.0
    %1046 = vmatprep.subr.mxu0 0.0
    %1047 = vmatpush2.msra.mxu0 0.0
    %1048 = vmatprep.subr.mxu0 0.0
    %1049 = vmatpush2.msra.mxu0 0.0
    %1050 = vmatprep.subr.mxu0 0.0
    %1051 = vmatpush2.msra.mxu0 0.0
    %1052 = vmatprep.subr.mxu0 0.0
    %1053 = vmatpush2.msra.mxu0 0.0
    %1054 = vmatprep.subr.mxu0 0.0
    %1055 = vmatpush2.msra.mxu0 0.0
    %1056 = vmatprep.subr.mxu0 0.0
    %1057 = vmatpush2.msra.mxu0 0.0
    %1058 = vmatprep.mubr.f32.mxu0 0.0
    %1059 = vmatmul.mubr.f32.gmra.mxu0 %v992
    %v1060 = vpop.f32.mrf.mxu0
    %v1061 = vadd.f32 0.0, %v1060
    %v1062 = vpop.f32.mrf.mxu0
    %1063 = vdwg.mxu0
    %v1064 = vadd.f32 %v991, %v1061
    %v1065 = vxor.u32 %v1064, 2147483648
    %v1066 = vmul.f32 %v1065, 1.442695
    %v1067 = vpow.pop %v1066
    %v1068 = vadd.f32 %v1067, 1.0
    %v1069 = vrcp.pop %v1068
    %v1070 = vmul.f32 1.0, %v1069
    %v1071 = vtanh.pop %v1064
    %v1072 = vmul.f32 %v1070, %v977
    %1074 = vrot.lane.b32.xlu0 %v1071, 64
    %v1075 = vpop.permute.xlu0 %1074
    %v1077 = vmul.f32 %v1070, %v1075
    %1079 = vrot.lane.b32.xlu0 %v1077, 32
    %v1080 = vpop.permute.xlu0 %1079
    %v1082 = vadd.f32 %v1072, %v1080
    %v1083 = vtanh.pop %v1082
    %1085 = vrot.lane.b32.xlu0 %v1083, 64
    %v1086 = vpop.permute.xlu0 %1085
    %v1088 = vmul.f32 %v1070, %v1086
    %1090 = vrot.lane.b32.xlu0 %v1088, 32
    %v1091 = vpop.permute.xlu0 %1090
    %s1093 = scalar_lea.vmem [#allocation2], 14
    %1094 = vst.msk [vmem:[%s1093] sm:$0x3] %vm358, %v1091
    %v1095 = vld [vmem:[%s4] sm:$0xff]
    %v1096 = vld [vmem:[%s4 + $0x8] sm:$0xff]
    %v1097 = vld [vmem:[%s4 + $0x10] sm:$0xff]
    %v1098 = vld [vmem:[%s4 + $0x18] sm:$0xff]
    %v1099 = vld [vmem:[#allocation4] sm:$0xff]
    %v1100 = vld [vmem:[#allocation4 + $0x8] sm:$0xff]
    %v1101 = vld [vmem:[#allocation4 + $0x10] sm:$0xff]
    %v1102 = vld [vmem:[#allocation4 + $0x18] sm:$0xff]
    %v1103 = vld [vmem:[%s6] sm:$0x1]
    %v1104 = vld [vmem:[#allocation2] sm:$0x3]
    %v1105 = vld [vmem:[#allocation2 + $0x2] sm:$0x3]
    %v1106 = vld [vmem:[#allocation2 + $0x4] sm:$0x3]
    %v1107 = vld [vmem:[#allocation2 + $0x6] sm:$0x3]
    %v1108 = vld [vmem:[#allocation2 + $0x8] sm:$0x3]
    %v1109 = vld [vmem:[#allocation2 + $0xa] sm:$0x3]
    %v1110 = vld [vmem:[#allocation2 + $0xc] sm:$0x3]
    %v1111 = vld [vmem:[#allocation2 + $0xe] sm:$0x3]
    %v1113 = vlaneseq
    %v1114 = vshrl.u32 %v1113, 7
    %v1115 = vsub.s32 0, %v1114
    %v1116 = vrot.slane %v1103, %v1115
    %v1126 = vcombine.low %v1104, %v1105
    %v1127 = vcombine.low %v1106, %v1107
    %v1129 = vunpack.c.l.s4 1983009808
    %v1130 = vunpack.c.0.s8 %v1129
    %v1131 = vlaneseq
    %v1132 = vshrl.u32 %v1131, 7
    %v1133 = vsub.s32 %v1130, %v1132
    %v1134 = vrot.slane %v1126, %v1133
    %v1136 = vunpack.c.l.s4 1983009808
    %v1137 = vunpack.c.0.s8 %v1136
    %v1138 = vlaneseq
    %v1139 = vshrl.u32 %v1138, 7
    %v1140 = vsub.s32 %v1137, %v1139
    %v1141 = vrot.slane %v1127, %v1140
    %v1142 = vcombine.low %v1134, %v1141
    %v1143 = vcombine.low %v1108, %v1109
    %v1144 = vcombine.low %v1110, %v1111
    %v1146 = vunpack.c.l.s4 1983009808
    %v1147 = vunpack.c.0.s8 %v1146
    %v1148 = vlaneseq
    %v1149 = vshrl.u32 %v1148, 7
    %v1150 = vsub.s32 %v1147, %v1149
    %v1151 = vrot.slane %v1143, %v1150
    %v1153 = vunpack.c.l.s4 1983009808
    %v1154 = vunpack.c.0.s8 %v1153
    %v1155 = vlaneseq
    %v1156 = vshrl.u32 %v1155, 7
    %v1157 = vsub.s32 %v1154, %v1156
    %v1158 = vrot.slane %v1144, %v1157
    %v1159 = vcombine.low %v1151, %v1158
    %v1160 = vsel %vm255, %v1142, 0
    %v1162 = vsel %vm255, %v1159, 0
    %1164 = vmatprep.subr.mxu0 0.0
    %1165 = vmatpush1.msra.mxu0 0.0
    %1166 = vmatprep.subr.mxu0 0.0
    %1167 = vmatpush1.msra.mxu0 0.0
    %1168 = vmatprep.subr.mxu0 0.0
    %1169 = vmatpush1.msra.mxu0 0.0
    %1170 = vmatprep.subr.mxu0 0.0
    %1171 = vmatpush1.msra.mxu0 0.0
    %1172 = vmatprep.subr.mxu0 0.0
    %1173 = vmatpush1.msra.mxu0 0.0
    %1174 = vmatprep.subr.mxu0 0.0
    %1175 = vmatpush1.msra.mxu0 0.0
    %1176 = vmatprep.subr.mxu0 0.0
    %1177 = vmatpush1.msra.mxu0 0.0
    %1178 = vmatprep.subr.mxu0 0.0
    %1179 = vmatpush1.msra.mxu0 0.0
    %1180 = vmatprep.subr.mxu0 0.0
    %1181 = vmatpush1.msra.mxu0 0.0
    %1182 = vmatprep.subr.mxu0 0.0
    %1183 = vmatpush1.msra.mxu0 0.0
    %1184 = vmatprep.subr.mxu0 0.0
    %1185 = vmatpush1.msra.mxu0 0.0
    %1186 = vmatprep.subr.mxu0 0.0
    %1187 = vmatpush1.msra.mxu0 0.0
    %1188 = vmatprep.subr.mxu0 0.0
    %1189 = vmatpush1.msra.mxu0 %v1098
    %1190 = vmatprep.subr.mxu0 0.0
    %1191 = vmatpush1.msra.mxu0 %v1097
    %1192 = vmatprep.subr.mxu0 0.0
    %1193 = vmatpush1.msra.mxu0 %v1096
    %1194 = vmatprep.subr.mxu0 0.0
    %1195 = vmatpush1.msra.mxu0 %v1095
    %1196 = vmatprep.subr.mxu0 0.0
    %1197 = vmatpush2.msra.mxu0 0.0
    %1198 = vmatprep.subr.mxu0 0.0
    %1199 = vmatpush2.msra.mxu0 0.0
    %1200 = vmatprep.subr.mxu0 0.0
    %1201 = vmatpush2.msra.mxu0 0.0
    %1202 = vmatprep.subr.mxu0 0.0
    %1203 = vmatpush2.msra.mxu0 0.0
    %1204 = vmatprep.subr.mxu0 0.0
    %1205 = vmatpush2.msra.mxu0 0.0
    %1206 = vmatprep.subr.mxu0 0.0
    %1207 = vmatpush2.msra.mxu0 0.0
    %1208 = vmatprep.subr.mxu0 0.0
    %1209 = vmatpush2.msra.mxu0 0.0
    %1210 = vmatprep.subr.mxu0 0.0
    %1211 = vmatpush2.msra.mxu0 0.0
    %1212 = vmatprep.subr.mxu0 0.0
    %1213 = vmatpush2.msra.mxu0 0.0
    %1214 = vmatprep.subr.mxu0 0.0
    %1215 = vmatpush2.msra.mxu0 0.0
    %1216 = vmatprep.subr.mxu0 0.0
    %1217 = vmatpush2.msra.mxu0 0.0
    %1218 = vmatprep.subr.mxu0 0.0
    %1219 = vmatpush2.msra.mxu0 0.0
    %1220 = vmatprep.subr.mxu0 0.0
    %1221 = vmatpush2.msra.mxu0 0.0
    %1222 = vmatprep.subr.mxu0 0.0
    %1223 = vmatpush2.msra.mxu0 0.0
    %1224 = vmatprep.subr.mxu0 0.0
    %1225 = vmatpush2.msra.mxu0 0.0
    %1226 = vmatprep.subr.mxu0 0.0
    %1227 = vmatpush2.msra.mxu0 0.0
    %1228 = vmatprep.mubr.f32.mxu0 0.0
    %1229 = vmatmul.mubr.f32.gmra.mxu0 %v1160
    %v1230 = vpop.f32.mrf.mxu0
    %v1231 = vadd.f32 %v1116, %v1230
    %v1232 = vpop.f32.mrf.mxu0
    %1233 = vmatprep.mubr.f32.mxu0 0.0
    %1234 = vmatmul.mubr.f32.gmra.mxu0 %v1162
    %v1235 = vpop.f32.mrf.mxu0
    %v1236 = vadd.f32 %v1116, %v1235
    %v1237 = vpop.f32.mrf.mxu0
    %1238 = vdwg.mxu0
    %v1241 = vcombine.high %v1231, %v1231
    %v1243 = vunpack.c.l.s4 1983009808
    %v1244 = vunpack.c.0.s8 %v1243
    %v1245 = vlaneseq
    %v1246 = vshrl.u32 %v1245, 7
    %v1247 = vsub.s32 %v1244, %v1246
    %v1248 = vrot.slane %v1231, %v1247
    %v1250 = vunpack.c.l.s4 1983009808
    %v1251 = vunpack.c.0.s8 %v1250
    %v1252 = vlaneseq
    %v1253 = vshrl.u32 %v1252, 7
    %v1254 = vsub.s32 %v1251, %v1253
    %v1255 = vrot.slane %v1241, %v1254
    %v1256 = vcombine.high %v1248, %v1248
    %v1257 = vcombine.high %v1255, %v1255
    %v1258 = vcombine.high %v1236, %v1236
    %v1260 = vunpack.c.l.s4 1983009808
    %v1261 = vunpack.c.0.s8 %v1260
    %v1262 = vlaneseq
    %v1263 = vshrl.u32 %v1262, 7
    %v1264 = vsub.s32 %v1261, %v1263
    %v1265 = vrot.slane %v1236, %v1264
    %v1267 = vunpack.c.l.s4 1983009808
    %v1268 = vunpack.c.0.s8 %v1267
    %v1269 = vlaneseq
    %v1270 = vshrl.u32 %v1269, 7
    %v1271 = vsub.s32 %v1268, %v1270
    %v1272 = vrot.slane %v1258, %v1271
    %v1273 = vcombine.high %v1265, %v1265
    %v1274 = vcombine.high %v1272, %v1272
    %1283 = vst [vmem:[#allocation3] sm:$0x3] %v1248
    %1284 = vst [vmem:[#allocation3 + $0x2] sm:$0x3] %v1256
    %1285 = vst [vmem:[#allocation3 + $0x4] sm:$0x3] %v1255
    %1286 = vst [vmem:[#allocation3 + $0x6] sm:$0x3] %v1257
    %1287 = vst [vmem:[#allocation3 + $0x8] sm:$0x3] %v1265
    %1288 = vst [vmem:[#allocation3 + $0xa] sm:$0x3] %v1273
    %1289 = vst [vmem:[#allocation3 + $0xc] sm:$0x3] %v1272
    %1290 = vst [vmem:[#allocation3 + $0xe] sm:$0x3] %v1274
    %v1291 = vld [vmem:[#allocation3] sm:$0x3]
    %1292 = vmatprep.subr.mxu0 0.0
    %1293 = vmatpush1.msra.mxu0 0.0
    %1294 = vmatprep.subr.mxu0 0.0
    %1295 = vmatpush1.msra.mxu0 0.0
    %1296 = vmatprep.subr.mxu0 0.0
    %1297 = vmatpush1.msra.mxu0 0.0
    %1298 = vmatprep.subr.mxu0 0.0
    %1299 = vmatpush1.msra.mxu0 0.0
    %1300 = vmatprep.subr.mxu0 0.0
    %1301 = vmatpush1.msra.mxu0 0.0
    %1302 = vmatprep.subr.mxu0 0.0
    %1303 = vmatpush1.msra.mxu0 0.0
    %1304 = vmatprep.subr.mxu0 0.0
    %1305 = vmatpush1.msra.mxu0 0.0
    %1306 = vmatprep.subr.mxu0 0.0
    %1307 = vmatpush1.msra.mxu0 0.0
    %1308 = vmatprep.subr.mxu0 0.0
    %1309 = vmatpush1.msra.mxu0 0.0
    %1310 = vmatprep.subr.mxu0 0.0
    %1311 = vmatpush1.msra.mxu0 0.0
    %1312 = vmatprep.subr.mxu0 0.0
    %1313 = vmatpush1.msra.mxu0 0.0
    %1314 = vmatprep.subr.mxu0 0.0
    %1315 = vmatpush1.msra.mxu0 0.0
    %1316 = vmatprep.subr.mxu0 0.0
    %1317 = vmatpush1.msra.mxu0 %v1102
    %1318 = vmatprep.subr.mxu0 0.0
    %1319 = vmatpush1.msra.mxu0 %v1101
    %1320 = vmatprep.subr.mxu0 0.0
    %1321 = vmatpush1.msra.mxu0 %v1100
    %1322 = vmatprep.subr.mxu0 0.0
    %1323 = vmatpush1.msra.mxu0 %v1099
    %1324 = vmatprep.subr.mxu0 0.0
    %1325 = vmatpush2.msra.mxu0 0.0
    %1326 = vmatprep.subr.mxu0 0.0
    %1327 = vmatpush2.msra.mxu0 0.0
    %1328 = vmatprep.subr.mxu0 0.0
    %1329 = vmatpush2.msra.mxu0 0.0
    %1330 = vmatprep.subr.mxu0 0.0
    %1331 = vmatpush2.msra.mxu0 0.0
    %1332 = vmatprep.subr.mxu0 0.0
    %1333 = vmatpush2.msra.mxu0 0.0
    %1334 = vmatprep.subr.mxu0 0.0
    %1335 = vmatpush2.msra.mxu0 0.0
    %1336 = vmatprep.subr.mxu0 0.0
    %1337 = vmatpush2.msra.mxu0 0.0
    %1338 = vmatprep.subr.mxu0 0.0
    %1339 = vmatpush2.msra.mxu0 0.0
    %1340 = vmatprep.subr.mxu0 0.0
    %1341 = vmatpush2.msra.mxu0 0.0
    %1342 = vmatprep.subr.mxu0 0.0
    %1343 = vmatpush2.msra.mxu0 0.0
    %1344 = vmatprep.subr.mxu0 0.0
    %1345 = vmatpush2.msra.mxu0 0.0
    %1346 = vmatprep.subr.mxu0 0.0
    %1347 = vmatpush2.msra.mxu0 0.0
    %1348 = vmatprep.subr.mxu0 0.0
    %1349 = vmatpush2.msra.mxu0 0.0
    %1350 = vmatprep.subr.mxu0 0.0
    %1351 = vmatpush2.msra.mxu0 0.0
    %1352 = vmatprep.subr.mxu0 0.0
    %1353 = vmatpush2.msra.mxu0 0.0
    %1354 = vmatprep.subr.mxu0 0.0
    %1355 = vmatpush2.msra.mxu0 0.0
    %1356 = vmatprep.mubr.f32.mxu0 0.0
    %1357 = vmatmul.mubr.f32.gmra.mxu0 %v257
    %v1358 = vpop.f32.mrf.mxu0
    %v1359 = vadd.f32 0.0, %v1358
    %v1360 = vpop.f32.mrf.mxu0
    %1361 = vdwg.mxu0
    %v1362 = vadd.f32 %v1291, %v1359
    %v1363 = vxor.u32 %v1362, 2147483648
    %v1364 = vmul.f32 %v1363, 1.442695
    %v1365 = vpow.pop %v1364
    %v1366 = vadd.f32 %v1365, 1.0
    %v1367 = vrcp.pop %v1366
    %v1368 = vmul.f32 1.0, %v1367
    %v1369 = vtanh.pop %v1362
    %v1370 = vmul.f32 %v1368, 0.0
    %1372 = vrot.lane.b32.xlu0 %v1369, 64
    %v1373 = vpop.permute.xlu0 %1372
    %v1375 = vmul.f32 %v1368, %v1373
    %1377 = vrot.lane.b32.xlu0 %v1375, 32
    %v1378 = vpop.permute.xlu0 %1377
    %v1380 = vadd.f32 %v1370, %v1378
    %v1381 = vtanh.pop %v1380
    %1383 = vrot.lane.b32.xlu0 %v1381, 64
    %v1384 = vpop.permute.xlu0 %1383
    %v1386 = vmul.f32 %v1368, %v1384
    %v1387 = vld [vmem:[%s360] sm:$0x3]
    %1389 = vrot.lane.b32.xlu0 %v1386, 32
    %v1390 = vpop.permute.xlu0 %1389
    %v1391 = vsel %vm255, %v1390, 0
    %1393 = vmatprep.subr.mxu0 0.0
    %1394 = vmatpush1.msra.mxu0 0.0
    %1395 = vmatprep.subr.mxu0 0.0
    %1396 = vmatpush1.msra.mxu0 0.0
    %1397 = vmatprep.subr.mxu0 0.0
    %1398 = vmatpush1.msra.mxu0 0.0
    %1399 = vmatprep.subr.mxu0 0.0
    %1400 = vmatpush1.msra.mxu0 0.0
    %1401 = vmatprep.subr.mxu0 0.0
    %1402 = vmatpush1.msra.mxu0 0.0
    %1403 = vmatprep.subr.mxu0 0.0
    %1404 = vmatpush1.msra.mxu0 0.0
    %1405 = vmatprep.subr.mxu0 0.0
    %1406 = vmatpush1.msra.mxu0 0.0
    %1407 = vmatprep.subr.mxu0 0.0
    %1408 = vmatpush1.msra.mxu0 0.0
    %1409 = vmatprep.subr.mxu0 0.0
    %1410 = vmatpush1.msra.mxu0 0.0
    %1411 = vmatprep.subr.mxu0 0.0
    %1412 = vmatpush1.msra.mxu0 0.0
    %1413 = vmatprep.subr.mxu0 0.0
    %1414 = vmatpush1.msra.mxu0 0.0
    %1415 = vmatprep.subr.mxu0 0.0
    %1416 = vmatpush1.msra.mxu0 0.0
    %1417 = vmatprep.subr.mxu0 0.0
    %1418 = vmatpush1.msra.mxu0 %v1102
    %1419 = vmatprep.subr.mxu0 0.0
    %1420 = vmatpush1.msra.mxu0 %v1101
    %1421 = vmatprep.subr.mxu0 0.0
    %1422 = vmatpush1.msra.mxu0 %v1100
    %1423 = vmatprep.subr.mxu0 0.0
    %1424 = vmatpush1.msra.mxu0 %v1099
    %1425 = vmatprep.subr.mxu0 0.0
    %1426 = vmatpush2.msra.mxu0 0.0
    %1427 = vmatprep.subr.mxu0 0.0
    %1428 = vmatpush2.msra.mxu0 0.0
    %1429 = vmatprep.subr.mxu0 0.0
    %1430 = vmatpush2.msra.mxu0 0.0
    %1431 = vmatprep.subr.mxu0 0.0
    %1432 = vmatpush2.msra.mxu0 0.0
    %1433 = vmatprep.subr.mxu0 0.0
    %1434 = vmatpush2.msra.mxu0 0.0
    %1435 = vmatprep.subr.mxu0 0.0
    %1436 = vmatpush2.msra.mxu0 0.0
    %1437 = vmatprep.subr.mxu0 0.0
    %1438 = vmatpush2.msra.mxu0 0.0
    %1439 = vmatprep.subr.mxu0 0.0
    %1440 = vmatpush2.msra.mxu0 0.0
    %1441 = vmatprep.subr.mxu0 0.0
    %1442 = vmatpush2.msra.mxu0 0.0
    %1443 = vmatprep.subr.mxu0 0.0
    %1444 = vmatpush2.msra.mxu0 0.0
    %1445 = vmatprep.subr.mxu0 0.0
    %1446 = vmatpush2.msra.mxu0 0.0
    %1447 = vmatprep.subr.mxu0 0.0
    %1448 = vmatpush2.msra.mxu0 0.0
    %1449 = vmatprep.subr.mxu0 0.0
    %1450 = vmatpush2.msra.mxu0 0.0
    %1451 = vmatprep.subr.mxu0 0.0
    %1452 = vmatpush2.msra.mxu0 0.0
    %1453 = vmatprep.subr.mxu0 0.0
    %1454 = vmatpush2.msra.mxu0 0.0
    %1455 = vmatprep.subr.mxu0 0.0
    %1456 = vmatpush2.msra.mxu0 0.0
    %1457 = vmatprep.mubr.f32.mxu0 0.0
    %1458 = vmatmul.mubr.f32.gmra.mxu0 %v1391
    %v1459 = vpop.f32.mrf.mxu0
    %v1460 = vadd.f32 0.0, %v1459
    %v1461 = vpop.f32.mrf.mxu0
    %1462 = vdwg.mxu0
    %v1463 = vadd.f32 %v1387, %v1460
    %v1464 = vxor.u32 %v1463, 2147483648
    %v1465 = vmul.f32 %v1464, 1.442695
    %v1466 = vpow.pop %v1465
    %v1467 = vadd.f32 %v1466, 1.0
    %v1468 = vrcp.pop %v1467
    %v1469 = vmul.f32 1.0, %v1468
    %v1470 = vtanh.pop %v1463
    %v1471 = vmul.f32 %v1469, %v1380
    %1473 = vrot.lane.b32.xlu0 %v1470, 64
    %v1474 = vpop.permute.xlu0 %1473
    %v1476 = vmul.f32 %v1469, %v1474
    %1478 = vrot.lane.b32.xlu0 %v1476, 32
    %v1479 = vpop.permute.xlu0 %1478
    %v1481 = vadd.f32 %v1471, %v1479
    %v1482 = vtanh.pop %v1481
    %1484 = vrot.lane.b32.xlu0 %v1482, 64
    %v1485 = vpop.permute.xlu0 %1484
    %v1487 = vmul.f32 %v1469, %v1485
    %v1488 = vld [vmem:[%s465] sm:$0x3]
    %1490 = vrot.lane.b32.xlu0 %v1487, 32
    %v1491 = vpop.permute.xlu0 %1490
    %v1492 = vsel %vm255, %v1491, 0
    %1494 = vmatprep.subr.mxu0 0.0
    %1495 = vmatpush1.msra.mxu0 0.0
    %1496 = vmatprep.subr.mxu0 0.0
    %1497 = vmatpush1.msra.mxu0 0.0
    %1498 = vmatprep.subr.mxu0 0.0
    %1499 = vmatpush1.msra.mxu0 0.0
    %1500 = vmatprep.subr.mxu0 0.0
    %1501 = vmatpush1.msra.mxu0 0.0
    %1502 = vmatprep.subr.mxu0 0.0
    %1503 = vmatpush1.msra.mxu0 0.0
    %1504 = vmatprep.subr.mxu0 0.0
    %1505 = vmatpush1.msra.mxu0 0.0
    %1506 = vmatprep.subr.mxu0 0.0
    %1507 = vmatpush1.msra.mxu0 0.0
    %1508 = vmatprep.subr.mxu0 0.0
    %1509 = vmatpush1.msra.mxu0 0.0
    %1510 = vmatprep.subr.mxu0 0.0
    %1511 = vmatpush1.msra.mxu0 0.0
    %1512 = vmatprep.subr.mxu0 0.0
    %1513 = vmatpush1.msra.mxu0 0.0
    %1514 = vmatprep.subr.mxu0 0.0
    %1515 = vmatpush1.msra.mxu0 0.0
    %1516 = vmatprep.subr.mxu0 0.0
    %1517 = vmatpush1.msra.mxu0 0.0
    %1518 = vmatprep.subr.mxu0 0.0
    %1519 = vmatpush1.msra.mxu0 %v1102
    %1520 = vmatprep.subr.mxu0 0.0
    %1521 = vmatpush1.msra.mxu0 %v1101
    %1522 = vmatprep.subr.mxu0 0.0
    %1523 = vmatpush1.msra.mxu0 %v1100
    %1524 = vmatprep.subr.mxu0 0.0
    %1525 = vmatpush1.msra.mxu0 %v1099
    %1526 = vmatprep.subr.mxu0 0.0
    %1527 = vmatpush2.msra.mxu0 0.0
    %1528 = vmatprep.subr.mxu0 0.0
    %1529 = vmatpush2.msra.mxu0 0.0
    %1530 = vmatprep.subr.mxu0 0.0
    %1531 = vmatpush2.msra.mxu0 0.0
    %1532 = vmatprep.subr.mxu0 0.0
    %1533 = vmatpush2.msra.mxu0 0.0
    %1534 = vmatprep.subr.mxu0 0.0
    %1535 = vmatpush2.msra.mxu0 0.0
    %1536 = vmatprep.subr.mxu0 0.0
    %1537 = vmatpush2.msra.mxu0 0.0
    %1538 = vmatprep.subr.mxu0 0.0
    %1539 = vmatpush2.msra.mxu0 0.0
    %1540 = vmatprep.subr.mxu0 0.0
    %1541 = vmatpush2.msra.mxu0 0.0
    %1542 = vmatprep.subr.mxu0 0.0
    %1543 = vmatpush2.msra.mxu0 0.0
    %1544 = vmatprep.subr.mxu0 0.0
    %1545 = vmatpush2.msra.mxu0 0.0
    %1546 = vmatprep.subr.mxu0 0.0
    %1547 = vmatpush2.msra.mxu0 0.0
    %1548 = vmatprep.subr.mxu0 0.0
    %1549 = vmatpush2.msra.mxu0 0.0
    %1550 = vmatprep.subr.mxu0 0.0
    %1551 = vmatpush2.msra.mxu0 0.0
    %1552 = vmatprep.subr.mxu0 0.0
    %1553 = vmatpush2.msra.mxu0 0.0
    %1554 = vmatprep.subr.mxu0 0.0
    %1555 = vmatpush2.msra.mxu0 0.0
    %1556 = vmatprep.subr.mxu0 0.0
    %1557 = vmatpush2.msra.mxu0 0.0
    %1558 = vmatprep.mubr.f32.mxu0 0.0
    %1559 = vmatmul.mubr.f32.gmra.mxu0 %v1492
    %v1560 = vpop.f32.mrf.mxu0
    %v1561 = vadd.f32 0.0, %v1560
    %v1562 = vpop.f32.mrf.mxu0
    %1563 = vdwg.mxu0
    %v1564 = vadd.f32 %v1488, %v1561
    %v1565 = vxor.u32 %v1564, 2147483648
    %v1566 = vmul.f32 %v1565, 1.442695
    %v1567 = vpow.pop %v1566
    %v1568 = vadd.f32 %v1567, 1.0
    %v1569 = vrcp.pop %v1568
    %v1570 = vmul.f32 1.0, %v1569
    %v1571 = vtanh.pop %v1564
    %v1572 = vmul.f32 %v1570, %v1481
    %1574 = vrot.lane.b32.xlu0 %v1571, 64
    %v1575 = vpop.permute.xlu0 %1574
    %v1577 = vmul.f32 %v1570, %v1575
    %1579 = vrot.lane.b32.xlu0 %v1577, 32
    %v1580 = vpop.permute.xlu0 %1579
    %v1582 = vadd.f32 %v1572, %v1580
    %v1583 = vtanh.pop %v1582
    %1585 = vrot.lane.b32.xlu0 %v1583, 64
    %v1586 = vpop.permute.xlu0 %1585
    %v1588 = vmul.f32 %v1570, %v1586
    %v1589 = vld [vmem:[%s570] sm:$0x3]
    %1591 = vrot.lane.b32.xlu0 %v1588, 32
    %v1592 = vpop.permute.xlu0 %1591
    %v1593 = vsel %vm255, %v1592, 0
    %1595 = vmatprep.subr.mxu0 0.0
    %1596 = vmatpush1.msra.mxu0 0.0
    %1597 = vmatprep.subr.mxu0 0.0
    %1598 = vmatpush1.msra.mxu0 0.0
    %1599 = vmatprep.subr.mxu0 0.0
    %1600 = vmatpush1.msra.mxu0 0.0
    %1601 = vmatprep.subr.mxu0 0.0
    %1602 = vmatpush1.msra.mxu0 0.0
    %1603 = vmatprep.subr.mxu0 0.0
    %1604 = vmatpush1.msra.mxu0 0.0
    %1605 = vmatprep.subr.mxu0 0.0
    %1606 = vmatpush1.msra.mxu0 0.0
    %1607 = vmatprep.subr.mxu0 0.0
    %1608 = vmatpush1.msra.mxu0 0.0
    %1609 = vmatprep.subr.mxu0 0.0
    %1610 = vmatpush1.msra.mxu0 0.0
    %1611 = vmatprep.subr.mxu0 0.0
    %1612 = vmatpush1.msra.mxu0 0.0
    %1613 = vmatprep.subr.mxu0 0.0
    %1614 = vmatpush1.msra.mxu0 0.0
    %1615 = vmatprep.subr.mxu0 0.0
    %1616 = vmatpush1.msra.mxu0 0.0
    %1617 = vmatprep.subr.mxu0 0.0
    %1618 = vmatpush1.msra.mxu0 0.0
    %1619 = vmatprep.subr.mxu0 0.0
    %1620 = vmatpush1.msra.mxu0 %v1102
    %1621 = vmatprep.subr.mxu0 0.0
    %1622 = vmatpush1.msra.mxu0 %v1101
    %1623 = vmatprep.subr.mxu0 0.0
    %1624 = vmatpush1.msra.mxu0 %v1100
    %1625 = vmatprep.subr.mxu0 0.0
    %1626 = vmatpush1.msra.mxu0 %v1099
    %1627 = vmatprep.subr.mxu0 0.0
    %1628 = vmatpush2.msra.mxu0 0.0
    %1629 = vmatprep.subr.mxu0 0.0
    %1630 = vmatpush2.msra.mxu0 0.0
    %1631 = vmatprep.subr.mxu0 0.0
    %1632 = vmatpush2.msra.mxu0 0.0
    %1633 = vmatprep.subr.mxu0 0.0
    %1634 = vmatpush2.msra.mxu0 0.0
    %1635 = vmatprep.subr.mxu0 0.0
    %1636 = vmatpush2.msra.mxu0 0.0
    %1637 = vmatprep.subr.mxu0 0.0
    %1638 = vmatpush2.msra.mxu0 0.0
    %1639 = vmatprep.subr.mxu0 0.0
    %1640 = vmatpush2.msra.mxu0 0.0
    %1641 = vmatprep.subr.mxu0 0.0
    %1642 = vmatpush2.msra.mxu0 0.0
    %1643 = vmatprep.subr.mxu0 0.0
    %1644 = vmatpush2.msra.mxu0 0.0
    %1645 = vmatprep.subr.mxu0 0.0
    %1646 = vmatpush2.msra.mxu0 0.0
    %1647 = vmatprep.subr.mxu0 0.0
    %1648 = vmatpush2.msra.mxu0 0.0
    %1649 = vmatprep.subr.mxu0 0.0
    %1650 = vmatpush2.msra.mxu0 0.0
    %1651 = vmatprep.subr.mxu0 0.0
    %1652 = vmatpush2.msra.mxu0 0.0
    %1653 = vmatprep.subr.mxu0 0.0
    %1654 = vmatpush2.msra.mxu0 0.0
    %1655 = vmatprep.subr.mxu0 0.0
    %1656 = vmatpush2.msra.mxu0 0.0
    %1657 = vmatprep.subr.mxu0 0.0
    %1658 = vmatpush2.msra.mxu0 0.0
    %1659 = vmatprep.mubr.f32.mxu0 0.0
    %1660 = vmatmul.mubr.f32.gmra.mxu0 %v1593
    %v1661 = vpop.f32.mrf.mxu0
    %v1662 = vadd.f32 0.0, %v1661
    %v1663 = vpop.f32.mrf.mxu0
    %1664 = vdwg.mxu0
    %v1665 = vadd.f32 %v1589, %v1662
    %v1666 = vxor.u32 %v1665, 2147483648
    %v1667 = vmul.f32 %v1666, 1.442695
    %v1668 = vpow.pop %v1667
    %v1669 = vadd.f32 %v1668, 1.0
    %v1670 = vrcp.pop %v1669
    %v1671 = vmul.f32 1.0, %v1670
    %v1672 = vtanh.pop %v1665
    %v1673 = vmul.f32 %v1671, %v1582
    %1675 = vrot.lane.b32.xlu0 %v1672, 64
    %v1676 = vpop.permute.xlu0 %1675
    %v1678 = vmul.f32 %v1671, %v1676
    %1680 = vrot.lane.b32.xlu0 %v1678, 32
    %v1681 = vpop.permute.xlu0 %1680
    %v1683 = vadd.f32 %v1673, %v1681
    %v1684 = vtanh.pop %v1683
    %1686 = vrot.lane.b32.xlu0 %v1684, 64
    %v1687 = vpop.permute.xlu0 %1686
    %v1689 = vmul.f32 %v1671, %v1687
    %v1690 = vld [vmem:[%s675] sm:$0x3]
    %1692 = vrot.lane.b32.xlu0 %v1689, 32
    %v1693 = vpop.permute.xlu0 %1692
    %v1694 = vsel %vm255, %v1693, 0
    %1696 = vmatprep.subr.mxu0 0.0
    %1697 = vmatpush1.msra.mxu0 0.0
    %1698 = vmatprep.subr.mxu0 0.0
    %1699 = vmatpush1.msra.mxu0 0.0
    %1700 = vmatprep.subr.mxu0 0.0
    %1701 = vmatpush1.msra.mxu0 0.0
    %1702 = vmatprep.subr.mxu0 0.0
    %1703 = vmatpush1.msra.mxu0 0.0
    %1704 = vmatprep.subr.mxu0 0.0
    %1705 = vmatpush1.msra.mxu0 0.0
    %1706 = vmatprep.subr.mxu0 0.0
    %1707 = vmatpush1.msra.mxu0 0.0
    %1708 = vmatprep.subr.mxu0 0.0
    %1709 = vmatpush1.msra.mxu0 0.0
    %1710 = vmatprep.subr.mxu0 0.0
    %1711 = vmatpush1.msra.mxu0 0.0
    %1712 = vmatprep.subr.mxu0 0.0
    %1713 = vmatpush1.msra.mxu0 0.0
    %1714 = vmatprep.subr.mxu0 0.0
    %1715 = vmatpush1.msra.mxu0 0.0
    %1716 = vmatprep.subr.mxu0 0.0
    %1717 = vmatpush1.msra.mxu0 0.0
    %1718 = vmatprep.subr.mxu0 0.0
    %1719 = vmatpush1.msra.mxu0 0.0
    %1720 = vmatprep.subr.mxu0 0.0
    %1721 = vmatpush1.msra.mxu0 %v1102
    %1722 = vmatprep.subr.mxu0 0.0
    %1723 = vmatpush1.msra.mxu0 %v1101
    %1724 = vmatprep.subr.mxu0 0.0
    %1725 = vmatpush1.msra.mxu0 %v1100
    %1726 = vmatprep.subr.mxu0 0.0
    %1727 = vmatpush1.msra.mxu0 %v1099
    %1728 = vmatprep.subr.mxu0 0.0
    %1729 = vmatpush2.msra.mxu0 0.0
    %1730 = vmatprep.subr.mxu0 0.0
    %1731 = vmatpush2.msra.mxu0 0.0
    %1732 = vmatprep.subr.mxu0 0.0
    %1733 = vmatpush2.msra.mxu0 0.0
    %1734 = vmatprep.subr.mxu0 0.0
    %1735 = vmatpush2.msra.mxu0 0.0
    %1736 = vmatprep.subr.mxu0 0.0
    %1737 = vmatpush2.msra.mxu0 0.0
    %1738 = vmatprep.subr.mxu0 0.0
    %1739 = vmatpush2.msra.mxu0 0.0
    %1740 = vmatprep.subr.mxu0 0.0
    %1741 = vmatpush2.msra.mxu0 0.0
    %1742 = vmatprep.subr.mxu0 0.0
    %1743 = vmatpush2.msra.mxu0 0.0
    %1744 = vmatprep.subr.mxu0 0.0
    %1745 = vmatpush2.msra.mxu0 0.0
    %1746 = vmatprep.subr.mxu0 0.0
    %1747 = vmatpush2.msra.mxu0 0.0
    %1748 = vmatprep.subr.mxu0 0.0
    %1749 = vmatpush2.msra.mxu0 0.0
    %1750 = vmatprep.subr.mxu0 0.0
    %1751 = vmatpush2.msra.mxu0 0.0
    %1752 = vmatprep.subr.mxu0 0.0
    %1753 = vmatpush2.msra.mxu0 0.0
    %1754 = vmatprep.subr.mxu0 0.0
    %1755 = vmatpush2.msra.mxu0 0.0
    %1756 = vmatprep.subr.mxu0 0.0
    %1757 = vmatpush2.msra.mxu0 0.0
    %1758 = vmatprep.subr.mxu0 0.0
    %1759 = vmatpush2.msra.mxu0 0.0
    %1760 = vmatprep.mubr.f32.mxu0 0.0
    %1761 = vmatmul.mubr.f32.gmra.mxu0 %v1694
    %v1762 = vpop.f32.mrf.mxu0
    %v1763 = vadd.f32 0.0, %v1762
    %v1764 = vpop.f32.mrf.mxu0
    %1765 = vdwg.mxu0
    %v1766 = vadd.f32 %v1690, %v1763
    %v1767 = vxor.u32 %v1766, 2147483648
    %v1768 = vmul.f32 %v1767, 1.442695
    %v1769 = vpow.pop %v1768
    %v1770 = vadd.f32 %v1769, 1.0
    %v1771 = vrcp.pop %v1770
    %v1772 = vmul.f32 1.0, %v1771
    %v1773 = vtanh.pop %v1766
    %v1774 = vmul.f32 %v1772, %v1683
    %1776 = vrot.lane.b32.xlu0 %v1773, 64
    %v1777 = vpop.permute.xlu0 %1776
    %v1779 = vmul.f32 %v1772, %v1777
    %1781 = vrot.lane.b32.xlu0 %v1779, 32
    %v1782 = vpop.permute.xlu0 %1781
    %v1784 = vadd.f32 %v1774, %v1782
    %v1785 = vtanh.pop %v1784
    %1787 = vrot.lane.b32.xlu0 %v1785, 64
    %v1788 = vpop.permute.xlu0 %1787
    %v1790 = vmul.f32 %v1772, %v1788
    %v1791 = vld [vmem:[%s780] sm:$0x3]
    %1793 = vrot.lane.b32.xlu0 %v1790, 32
    %v1794 = vpop.permute.xlu0 %1793
    %v1795 = vsel %vm255, %v1794, 0
    %1797 = vmatprep.subr.mxu0 0.0
    %1798 = vmatpush1.msra.mxu0 0.0
    %1799 = vmatprep.subr.mxu0 0.0
    %1800 = vmatpush1.msra.mxu0 0.0
    %1801 = vmatprep.subr.mxu0 0.0
    %1802 = vmatpush1.msra.mxu0 0.0
    %1803 = vmatprep.subr.mxu0 0.0
    %1804 = vmatpush1.msra.mxu0 0.0
    %1805 = vmatprep.subr.mxu0 0.0
    %1806 = vmatpush1.msra.mxu0 0.0
    %1807 = vmatprep.subr.mxu0 0.0
    %1808 = vmatpush1.msra.mxu0 0.0
    %1809 = vmatprep.subr.mxu0 0.0
    %1810 = vmatpush1.msra.mxu0 0.0
    %1811 = vmatprep.subr.mxu0 0.0
    %1812 = vmatpush1.msra.mxu0 0.0
    %1813 = vmatprep.subr.mxu0 0.0
    %1814 = vmatpush1.msra.mxu0 0.0
    %1815 = vmatprep.subr.mxu0 0.0
    %1816 = vmatpush1.msra.mxu0 0.0
    %1817 = vmatprep.subr.mxu0 0.0
    %1818 = vmatpush1.msra.mxu0 0.0
    %1819 = vmatprep.subr.mxu0 0.0
    %1820 = vmatpush1.msra.mxu0 0.0
    %1821 = vmatprep.subr.mxu0 0.0
    %1822 = vmatpush1.msra.mxu0 %v1102
    %1823 = vmatprep.subr.mxu0 0.0
    %1824 = vmatpush1.msra.mxu0 %v1101
    %1825 = vmatprep.subr.mxu0 0.0
    %1826 = vmatpush1.msra.mxu0 %v1100
    %1827 = vmatprep.subr.mxu0 0.0
    %1828 = vmatpush1.msra.mxu0 %v1099
    %1829 = vmatprep.subr.mxu0 0.0
    %1830 = vmatpush2.msra.mxu0 0.0
    %1831 = vmatprep.subr.mxu0 0.0
    %1832 = vmatpush2.msra.mxu0 0.0
    %1833 = vmatprep.subr.mxu0 0.0
    %1834 = vmatpush2.msra.mxu0 0.0
    %1835 = vmatprep.subr.mxu0 0.0
    %1836 = vmatpush2.msra.mxu0 0.0
    %1837 = vmatprep.subr.mxu0 0.0
    %1838 = vmatpush2.msra.mxu0 0.0
    %1839 = vmatprep.subr.mxu0 0.0
    %1840 = vmatpush2.msra.mxu0 0.0
    %1841 = vmatprep.subr.mxu0 0.0
    %1842 = vmatpush2.msra.mxu0 0.0
    %1843 = vmatprep.subr.mxu0 0.0
    %1844 = vmatpush2.msra.mxu0 0.0
    %1845 = vmatprep.subr.mxu0 0.0
    %1846 = vmatpush2.msra.mxu0 0.0
    %1847 = vmatprep.subr.mxu0 0.0
    %1848 = vmatpush2.msra.mxu0 0.0
    %1849 = vmatprep.subr.mxu0 0.0
    %1850 = vmatpush2.msra.mxu0 0.0
    %1851 = vmatprep.subr.mxu0 0.0
    %1852 = vmatpush2.msra.mxu0 0.0
    %1853 = vmatprep.subr.mxu0 0.0
    %1854 = vmatpush2.msra.mxu0 0.0
    %1855 = vmatprep.subr.mxu0 0.0
    %1856 = vmatpush2.msra.mxu0 0.0
    %1857 = vmatprep.subr.mxu0 0.0
    %1858 = vmatpush2.msra.mxu0 0.0
    %1859 = vmatprep.subr.mxu0 0.0
    %1860 = vmatpush2.msra.mxu0 0.0
    %1861 = vmatprep.mubr.f32.mxu0 0.0
    %1862 = vmatmul.mubr.f32.gmra.mxu0 %v1795
    %v1863 = vpop.f32.mrf.mxu0
    %v1864 = vadd.f32 0.0, %v1863
    %v1865 = vpop.f32.mrf.mxu0
    %1866 = vdwg.mxu0
    %v1867 = vadd.f32 %v1791, %v1864
    %v1868 = vxor.u32 %v1867, 2147483648
    %v1869 = vmul.f32 %v1868, 1.442695
    %v1870 = vpow.pop %v1869
    %v1871 = vadd.f32 %v1870, 1.0
    %v1872 = vrcp.pop %v1871
    %v1873 = vmul.f32 1.0, %v1872
    %v1874 = vtanh.pop %v1867
    %v1875 = vmul.f32 %v1873, %v1784
    %1877 = vrot.lane.b32.xlu0 %v1874, 64
    %v1878 = vpop.permute.xlu0 %1877
    %v1880 = vmul.f32 %v1873, %v1878
    %1882 = vrot.lane.b32.xlu0 %v1880, 32
    %v1883 = vpop.permute.xlu0 %1882
    %v1885 = vadd.f32 %v1875, %v1883
    %v1886 = vtanh.pop %v1885
    %1888 = vrot.lane.b32.xlu0 %v1886, 64
    %v1889 = vpop.permute.xlu0 %1888
    %v1891 = vmul.f32 %v1873, %v1889
    %v1892 = vld [vmem:[%s885] sm:$0x3]
    %1894 = vrot.lane.b32.xlu0 %v1891, 32
    %v1895 = vpop.permute.xlu0 %1894
    %v1896 = vsel %vm255, %v1895, 0
    %1898 = vmatprep.subr.mxu0 0.0
    %1899 = vmatpush1.msra.mxu0 0.0
    %1900 = vmatprep.subr.mxu0 0.0
    %1901 = vmatpush1.msra.mxu0 0.0
    %1902 = vmatprep.subr.mxu0 0.0
    %1903 = vmatpush1.msra.mxu0 0.0
    %1904 = vmatprep.subr.mxu0 0.0
    %1905 = vmatpush1.msra.mxu0 0.0
    %1906 = vmatprep.subr.mxu0 0.0
    %1907 = vmatpush1.msra.mxu0 0.0
    %1908 = vmatprep.subr.mxu0 0.0
    %1909 = vmatpush1.msra.mxu0 0.0
    %1910 = vmatprep.subr.mxu0 0.0
    %1911 = vmatpush1.msra.mxu0 0.0
    %1912 = vmatprep.subr.mxu0 0.0
    %1913 = vmatpush1.msra.mxu0 0.0
    %1914 = vmatprep.subr.mxu0 0.0
    %1915 = vmatpush1.msra.mxu0 0.0
    %1916 = vmatprep.subr.mxu0 0.0
    %1917 = vmatpush1.msra.mxu0 0.0
    %1918 = vmatprep.subr.mxu0 0.0
    %1919 = vmatpush1.msra.mxu0 0.0
    %1920 = vmatprep.subr.mxu0 0.0
    %1921 = vmatpush1.msra.mxu0 0.0
    %1922 = vmatprep.subr.mxu0 0.0
    %1923 = vmatpush1.msra.mxu0 %v1102
    %1924 = vmatprep.subr.mxu0 0.0
    %1925 = vmatpush1.msra.mxu0 %v1101
    %1926 = vmatprep.subr.mxu0 0.0
    %1927 = vmatpush1.msra.mxu0 %v1100
    %1928 = vmatprep.subr.mxu0 0.0
    %1929 = vmatpush1.msra.mxu0 %v1099
    %1930 = vmatprep.subr.mxu0 0.0
    %1931 = vmatpush2.msra.mxu0 0.0
    %1932 = vmatprep.subr.mxu0 0.0
    %1933 = vmatpush2.msra.mxu0 0.0
    %1934 = vmatprep.subr.mxu0 0.0
    %1935 = vmatpush2.msra.mxu0 0.0
    %1936 = vmatprep.subr.mxu0 0.0
    %1937 = vmatpush2.msra.mxu0 0.0
    %1938 = vmatprep.subr.mxu0 0.0
    %1939 = vmatpush2.msra.mxu0 0.0
    %1940 = vmatprep.subr.mxu0 0.0
    %1941 = vmatpush2.msra.mxu0 0.0
    %1942 = vmatprep.subr.mxu0 0.0
    %1943 = vmatpush2.msra.mxu0 0.0
    %1944 = vmatprep.subr.mxu0 0.0
    %1945 = vmatpush2.msra.mxu0 0.0
    %1946 = vmatprep.subr.mxu0 0.0
    %1947 = vmatpush2.msra.mxu0 0.0
    %1948 = vmatprep.subr.mxu0 0.0
    %1949 = vmatpush2.msra.mxu0 0.0
    %1950 = vmatprep.subr.mxu0 0.0
    %1951 = vmatpush2.msra.mxu0 0.0
    %1952 = vmatprep.subr.mxu0 0.0
    %1953 = vmatpush2.msra.mxu0 0.0
    %1954 = vmatprep.subr.mxu0 0.0
    %1955 = vmatpush2.msra.mxu0 0.0
    %1956 = vmatprep.subr.mxu0 0.0
    %1957 = vmatpush2.msra.mxu0 0.0
    %1958 = vmatprep.subr.mxu0 0.0
    %1959 = vmatpush2.msra.mxu0 0.0
    %1960 = vmatprep.subr.mxu0 0.0
    %1961 = vmatpush2.msra.mxu0 0.0
    %1962 = vmatprep.mubr.f32.mxu0 0.0
    %1963 = vmatmul.mubr.f32.gmra.mxu0 %v1896
    %v1964 = vpop.f32.mrf.mxu0
    %v1965 = vadd.f32 0.0, %v1964
    %v1966 = vpop.f32.mrf.mxu0
    %1967 = vdwg.mxu0
    %v1968 = vadd.f32 %v1892, %v1965
    %v1969 = vxor.u32 %v1968, 2147483648
    %v1970 = vmul.f32 %v1969, 1.442695
    %v1971 = vpow.pop %v1970
    %v1972 = vadd.f32 %v1971, 1.0
    %v1973 = vrcp.pop %v1972
    %v1974 = vmul.f32 1.0, %v1973
    %v1975 = vtanh.pop %v1968
    %v1976 = vmul.f32 %v1974, %v1885
    %1978 = vrot.lane.b32.xlu0 %v1975, 64
    %v1979 = vpop.permute.xlu0 %1978
    %v1981 = vmul.f32 %v1974, %v1979
    %1983 = vrot.lane.b32.xlu0 %v1981, 32
    %v1984 = vpop.permute.xlu0 %1983
    %v1986 = vadd.f32 %v1976, %v1984
    %v1987 = vtanh.pop %v1986
    %1989 = vrot.lane.b32.xlu0 %v1987, 64
    %v1990 = vpop.permute.xlu0 %1989
    %v1992 = vmul.f32 %v1974, %v1990
    %v1993 = vld [vmem:[%s990] sm:$0x3]
    %1995 = vrot.lane.b32.xlu0 %v1992, 32
    %v1996 = vpop.permute.xlu0 %1995
    %v1997 = vsel %vm255, %v1996, 0
    %1999 = vmatprep.subr.mxu0 0.0
    %2000 = vmatpush1.msra.mxu0 0.0
    %2001 = vmatprep.subr.mxu0 0.0
    %2002 = vmatpush1.msra.mxu0 0.0
    %2003 = vmatprep.subr.mxu0 0.0
    %2004 = vmatpush1.msra.mxu0 0.0
    %2005 = vmatprep.subr.mxu0 0.0
    %2006 = vmatpush1.msra.mxu0 0.0
    %2007 = vmatprep.subr.mxu0 0.0
    %2008 = vmatpush1.msra.mxu0 0.0
    %2009 = vmatprep.subr.mxu0 0.0
    %2010 = vmatpush1.msra.mxu0 0.0
    %2011 = vmatprep.subr.mxu0 0.0
    %2012 = vmatpush1.msra.mxu0 0.0
    %2013 = vmatprep.subr.mxu0 0.0
    %2014 = vmatpush1.msra.mxu0 0.0
    %2015 = vmatprep.subr.mxu0 0.0
    %2016 = vmatpush1.msra.mxu0 0.0
    %2017 = vmatprep.subr.mxu0 0.0
    %2018 = vmatpush1.msra.mxu0 0.0
    %2019 = vmatprep.subr.mxu0 0.0
    %2020 = vmatpush1.msra.mxu0 0.0
    %2021 = vmatprep.subr.mxu0 0.0
    %2022 = vmatpush1.msra.mxu0 0.0
    %2023 = vmatprep.subr.mxu0 0.0
    %2024 = vmatpush1.msra.mxu0 %v1102
    %2025 = vmatprep.subr.mxu0 0.0
    %2026 = vmatpush1.msra.mxu0 %v1101
    %2027 = vmatprep.subr.mxu0 0.0
    %2028 = vmatpush1.msra.mxu0 %v1100
    %2029 = vmatprep.subr.mxu0 0.0
    %2030 = vmatpush1.msra.mxu0 %v1099
    %2031 = vmatprep.subr.mxu0 0.0
    %2032 = vmatpush2.msra.mxu0 0.0
    %2033 = vmatprep.subr.mxu0 0.0
    %2034 = vmatpush2.msra.mxu0 0.0
    %2035 = vmatprep.subr.mxu0 0.0
    %2036 = vmatpush2.msra.mxu0 0.0
    %2037 = vmatprep.subr.mxu0 0.0
    %2038 = vmatpush2.msra.mxu0 0.0
    %2039 = vmatprep.subr.mxu0 0.0
    %2040 = vmatpush2.msra.mxu0 0.0
    %2041 = vmatprep.subr.mxu0 0.0
    %2042 = vmatpush2.msra.mxu0 0.0
    %2043 = vmatprep.subr.mxu0 0.0
    %2044 = vmatpush2.msra.mxu0 0.0
    %2045 = vmatprep.subr.mxu0 0.0
    %2046 = vmatpush2.msra.mxu0 0.0
    %2047 = vmatprep.subr.mxu0 0.0
    %2048 = vmatpush2.msra.mxu0 0.0
    %2049 = vmatprep.subr.mxu0 0.0
    %2050 = vmatpush2.msra.mxu0 0.0
    %2051 = vmatprep.subr.mxu0 0.0
    %2052 = vmatpush2.msra.mxu0 0.0
    %2053 = vmatprep.subr.mxu0 0.0
    %2054 = vmatpush2.msra.mxu0 0.0
    %2055 = vmatprep.subr.mxu0 0.0
    %2056 = vmatpush2.msra.mxu0 0.0
    %2057 = vmatprep.subr.mxu0 0.0
    %2058 = vmatpush2.msra.mxu0 0.0
    %2059 = vmatprep.subr.mxu0 0.0
    %2060 = vmatpush2.msra.mxu0 0.0
    %2061 = vmatprep.subr.mxu0 0.0
    %2062 = vmatpush2.msra.mxu0 0.0
    %2063 = vmatprep.mubr.f32.mxu0 0.0
    %2064 = vmatmul.mubr.f32.gmra.mxu0 %v1997
    %v2065 = vpop.f32.mrf.mxu0
    %v2066 = vadd.f32 0.0, %v2065
    %v2067 = vpop.f32.mrf.mxu0
    %2068 = vdwg.mxu0
    %v2069 = vadd.f32 %v1993, %v2066
    %v2070 = vxor.u32 %v2069, 2147483648
    %v2071 = vmul.f32 %v2070, 1.442695
    %v2072 = vpow.pop %v2071
    %v2073 = vadd.f32 %v2072, 1.0
    %v2074 = vrcp.pop %v2073
    %v2075 = vmul.f32 1.0, %v2074
    %v2076 = vtanh.pop %v2069
    %v2077 = vmul.f32 %v2075, %v1986
    %2079 = vrot.lane.b32.xlu0 %v2076, 64
    %v2080 = vpop.permute.xlu0 %2079
    %v2082 = vmul.f32 %v2075, %v2080
    %2084 = vrot.lane.b32.xlu0 %v2082, 32
    %v2085 = vpop.permute.xlu0 %2084
    %v2087 = vadd.f32 %v2077, %v2085
    %v2088 = vtanh.pop %v2087
    %2090 = vrot.lane.b32.xlu0 %v2088, 64
    %v2091 = vpop.permute.xlu0 %2090
    %v2093 = vmul.f32 %v2075, %v2091
    %v2094 = vld [vmem:[%s7] sm:$0xff]
    %v2095 = vld [vmem:[%s7 + $0x8] sm:$0xff]
    %v2096 = vld [vmem:[%s7 + $0x10] sm:$0xff]
    %v2097 = vld [vmem:[%s7 + $0x18] sm:$0xff]
    %v2098 = vld [vmem:[#allocation7] sm:$0x1]
    %v2100 = vlaneseq
    %v2101 = vshrl.u32 %v2100, 7
    %v2102 = vsub.s32 0, %v2101
    %v2103 = vrot.slane %v2098, %v2102
    %2106 = vrot.lane.b32.xlu0 %v2093, 32
    %v2107 = vpop.permute.xlu0 %2106
    %v2108 = vsel %vm255, %v2107, 0
    %2110 = vmatprep.subr.mxu0 0.0
    %2111 = vmatpush1.msra.mxu0 0.0
    %2112 = vmatprep.subr.mxu0 0.0
    %2113 = vmatpush1.msra.mxu0 0.0
    %2114 = vmatprep.subr.mxu0 0.0
    %2115 = vmatpush1.msra.mxu0 0.0
    %2116 = vmatprep.subr.mxu0 0.0
    %2117 = vmatpush1.msra.mxu0 0.0
    %2118 = vmatprep.subr.mxu0 0.0
    %2119 = vmatpush1.msra.mxu0 0.0
    %2120 = vmatprep.subr.mxu0 0.0
    %2121 = vmatpush1.msra.mxu0 0.0
    %2122 = vmatprep.subr.mxu0 0.0
    %2123 = vmatpush1.msra.mxu0 0.0
    %2124 = vmatprep.subr.mxu0 0.0
    %2125 = vmatpush1.msra.mxu0 0.0
    %2126 = vmatprep.subr.mxu0 0.0
    %2127 = vmatpush1.msra.mxu0 0.0
    %2128 = vmatprep.subr.mxu0 0.0
    %2129 = vmatpush1.msra.mxu0 0.0
    %2130 = vmatprep.subr.mxu0 0.0
    %2131 = vmatpush1.msra.mxu0 0.0
    %2132 = vmatprep.subr.mxu0 0.0
    %2133 = vmatpush1.msra.mxu0 0.0
    %2134 = vmatprep.subr.mxu0 0.0
    %2135 = vmatpush1.msra.mxu0 %v2097
    %2136 = vmatprep.subr.mxu0 0.0
    %2137 = vmatpush1.msra.mxu0 %v2096
    %2138 = vmatprep.subr.mxu0 0.0
    %2139 = vmatpush1.msra.mxu0 %v2095
    %2140 = vmatprep.subr.mxu0 0.0
    %2141 = vmatpush1.msra.mxu0 %v2094
    %2142 = vmatprep.subr.mxu0 0.0
    %2143 = vmatpush2.msra.mxu0 0.0
    %2144 = vmatprep.subr.mxu0 0.0
    %2145 = vmatpush2.msra.mxu0 0.0
    %2146 = vmatprep.subr.mxu0 0.0
    %2147 = vmatpush2.msra.mxu0 0.0
    %2148 = vmatprep.subr.mxu0 0.0
    %2149 = vmatpush2.msra.mxu0 0.0
    %2150 = vmatprep.subr.mxu0 0.0
    %2151 = vmatpush2.msra.mxu0 0.0
    %2152 = vmatprep.subr.mxu0 0.0
    %2153 = vmatpush2.msra.mxu0 0.0
    %2154 = vmatprep.subr.mxu0 0.0
    %2155 = vmatpush2.msra.mxu0 0.0
    %2156 = vmatprep.subr.mxu0 0.0
    %2157 = vmatpush2.msra.mxu0 0.0
    %2158 = vmatprep.subr.mxu0 0.0
    %2159 = vmatpush2.msra.mxu0 0.0
    %2160 = vmatprep.subr.mxu0 0.0
    %2161 = vmatpush2.msra.mxu0 0.0
    %2162 = vmatprep.subr.mxu0 0.0
    %2163 = vmatpush2.msra.mxu0 0.0
    %2164 = vmatprep.subr.mxu0 0.0
    %2165 = vmatpush2.msra.mxu0 0.0
    %2166 = vmatprep.subr.mxu0 0.0
    %2167 = vmatpush2.msra.mxu0 0.0
    %2168 = vmatprep.subr.mxu0 0.0
    %2169 = vmatpush2.msra.mxu0 0.0
    %2170 = vmatprep.subr.mxu0 0.0
    %2171 = vmatpush2.msra.mxu0 0.0
    %2172 = vmatprep.subr.mxu0 0.0
    %2173 = vmatpush2.msra.mxu0 0.0
    %2174 = vmatprep.mubr.f32.mxu0 0.0
    %2175 = vmatmul.mubr.f32.gmra.mxu0 %v2108
    %v2176 = vpop.f32.mrf.mxu0
    %v2177 = vadd.f32 %v2103, %v2176
    %v2178 = vpop.f32.mrf.mxu0
    %2179 = vdwg.mxu0
    %vm2180 = vcmask 74752
    %2181 = vst.msk [vmem:[#allocation9] sm:$0x3] %vm2180, %v2177
    // Predicated region
    $region46: #{lstm_forward.1} parent=1 // pred_check
      _
    $region47: #{lstm_forward.1} parent=1 // pred_check_branch
      %2183 = sbr.rel (0) target = $region49
    $region48: #{lstm_forward.1} parent=1 // pred_region
      %s2185 = ssub.s32 32, 32
      %2186 = vsyncadd [#allocation6], %s2185
      %s2188 = sshll.u32 [#allocation9], 4
      %s2189 = int_to_ptr.vmem [resolvable:$true] %s2188
      %2191 = dma.vmem_to_hbm [thread:$0]  %s2189, 32, %s9, [#allocation6]
    $region49: #{lstm_forward.1} parent=1 // pred_fallthru
      _
    // Predicated region
    $region50: #{lstm_forward.1} parent=1 // pred_check
      _
    $region51: #{lstm_forward.1} parent=1 // pred_check_branch
      %2193 = sbr.rel (0) target = $region53
    $region52: #{lstm_forward.1} parent=1 // pred_region
      %2194 = dma.done [#allocation6], 32
    $region53: #{lstm_forward.1} parent=1 // pred_fallthru
      _
    %2195 = vsyncpa [#allocation5], 1
    %2196 = vsyncpa [#allocation8], 1
    %2197 = vsyncpa [#allocation6], 1

</llo_original>
